<compile_context>
chip_gen: v7x
topology: tpu7x:2x2x1
jax: 0.10.0
libtpu: 0.0.40
codegen_flags: <defaults>
</compile_context>

<pallas_src>
import jax
import jax.numpy as jnp
from jax.experimental import pallas as pl
from jax.experimental.pallas import tpu as pltpu

IN_DIM = 2
HIDDEN = 512
NEG_SLOPE = 0.2
MAX_TB = 256  # batch tile: aligned to the 256x256 MXU on v6e/v7x


def _leaky_relu(h):
    return jnp.where(h > 0, h, NEG_SLOPE * h)


def _round_up(n, m):
    return ((n + m - 1) // m) * m


def mlp_kernel(x_ref, w0_ref, b_ref, w123_ref, o_ref):
    # x_ref   : (TB, 2)        f32   (batch tile)
    # w0_ref  : (2, 512)       f32   (layer-0 weight, tiny -> kept f32)
    # b_ref   : (4, 512)       f32   (all four biases, row l = layer l)
    # w123_ref: (512, 3*512)   bf16  (layers 1..3 packed along lanes)
    # o_ref   : (TB, 512)      f32
    x = x_ref[...]

    # Layer 0: K=2 contraction done on the VPU (two broadcast mul-adds)
    # instead of a degenerate (TB,2)@(2,512) MXU matmul.
    h = (x[:, 0:1] * w0_ref[0:1, :]
         + x[:, 1:2] * w0_ref[1:2, :]
         + b_ref[0:1, :])
    h = _leaky_relu(h)

    # Layers 1..3: bf16 x bf16 MXU matmuls with f32 accumulation.
    for layer in range(3):
        w = w123_ref[:, layer * HIDDEN:(layer + 1) * HIDDEN]  # (512,512) bf16
        h = jnp.dot(h.astype(jnp.bfloat16), w,
                    preferred_element_type=jnp.float32)
        h = h + b_ref[layer + 1:layer + 2, :]
        if layer < 2:  # no activation after the final Linear
            h = _leaky_relu(h)

    o_ref[...] = h.astype(o_ref.dtype)


@jax.jit
def control_mapping_network(x, params):
    """x: (B, 2) float32.  Returns (B, 512) float32."""
    B = x.shape[0]
    # Batch tile: MXU-aligned 256 rows when B is large, else just pad to 8.
    TB = min(MAX_TB, _round_up(B, 8))
    B_pad = _round_up(B, TB)
    if B_pad != B:
        x = jnp.pad(x, ((0, B_pad - B), (0, 0)))

    out = pl.pallas_call(
        mlp_kernel,
        out_shape=jax.ShapeDtypeStruct((B_pad, HIDDEN), jnp.float32),
        grid=(B_pad // TB,),
        in_specs=[
            pl.BlockSpec((TB, IN_DIM), lambda i: (i, 0)),          # x tile
            pl.BlockSpec((IN_DIM, HIDDEN), lambda i: (0, 0)),      # w0 (resident)
            pl.BlockSpec((4, HIDDEN), lambda i: (0, 0)),           # biases (resident)
            pl.BlockSpec((HIDDEN, 3 * HIDDEN), lambda i: (0, 0)),  # w1..w3 (resident)
        ],
        out_specs=pl.BlockSpec((TB, HIDDEN), lambda i: (i, 0)),
        compiler_params=pltpu.CompilerParams(
            dimension_semantics=("parallel",)),
    )(x, params["w0"], params["b"], params["w123"])
    return out[:B]


def init_params(key):
    """Synthetic PyTorch-style uniform fan-in init, packed for the kernel."""
    dims = [(IN_DIM, HIDDEN), (HIDDEN, HIDDEN), (HIDDEN, HIDDEN), (HIDDEN, HIDDEN)]
    keys = jax.random.split(key, 2 * len(dims))
    ws, bs = [], []
    for i, (fan_in, fan_out) in enumerate(dims):
        bound = 1.0 / (fan_in ** 0.5)
        ws.append(jax.random.uniform(keys[2 * i], (fan_in, fan_out),
                                     jnp.float32, -bound, bound))
        bs.append(jax.random.uniform(keys[2 * i + 1], (fan_out,),
                                     jnp.float32, -bound, bound))
    return {
        "w0": ws[0],                                                   # (2,512) f32
        "w123": jnp.concatenate(ws[1:], axis=1).astype(jnp.bfloat16),  # (512,1536) bf16
        "b": jnp.stack(bs, axis=0),                                    # (4,512) f32
    }


def reference_forward(x, params):
    """Pure-JAX reference mirroring the kernel's bf16 casts."""
    w0 = params["w0"]
    b = params["b"]
    w123 = params["w123"].astype(jnp.float32)
    h = x[:, 0:1] * w0[0:1, :] + x[:, 1:2] * w0[1:2, :] + b[0:1, :]
    h = _leaky_relu(h)
    for layer in range(3):
        w = w123[:, layer * HIDDEN:(layer + 1) * HIDDEN]
        h = h.astype(jnp.bfloat16).astype(jnp.float32) @ w + b[layer + 1:layer + 2, :]
        if layer < 2:
            h = _leaky_relu(h)
    return h


if __name__ == "__main__":
    key = jax.random.PRNGKey(0)
    pkey, xkey = jax.random.split(key)
    params = init_params(pkey)

    # Small batch of 2-D control vectors (single-tile path).
    B = 8
    x = jax.random.normal(xkey, (B, IN_DIM), jnp.float32)
    y = jax.block_until_ready(control_mapping_network(x, params))
    y_ref = reference_forward(x, params)
    assert y.shape == (B, HIDDEN), y.shape
    assert jnp.allclose(y, y_ref, atol=2e-3, rtol=2e-3), "mismatch vs reference (B=8)"

    # Multi-tile + batch-padding path (grid of 2, TB=256).
    B2 = 300
    x2 = jax.random.normal(jax.random.PRNGKey(1), (B2, IN_DIM), jnp.float32)
    y2 = jax.block_until_ready(control_mapping_network(x2, params))
    y2_ref = reference_forward(x2, params)
    assert y2.shape == (B2, HIDDEN), y2.shape
    assert jnp.allclose(y2, y2_ref, atol=2e-3, rtol=2e-3), "mismatch vs reference (B=300)"

    print("KERNEL_OK")
</pallas_src>

<mosaic_0001>
module attributes {stable_mosaic.version = 11 : i64} {
  func.func @mlp_kernel(%arg0: i32, %arg1: memref<8x2xf32, #tpu.memory_space<vmem>>, %arg2: memref<2x512xf32, #tpu.memory_space<vmem>>, %arg3: memref<4x512xf32, #tpu.memory_space<vmem>>, %arg4: memref<512x1536xbf16, #tpu.memory_space<vmem>>, %arg5: memref<8x512xf32, #tpu.memory_space<vmem>>) attributes {dimension_semantics = [#tpu.dimension_semantics<parallel>], iteration_bounds = array<i64: 1>, scalar_prefetch = 0 : i64, scratch_operands = 0 : i64, tpu.core_type = #tpu.core_type<tc>, window_params = [{transform_indices = @transform_0, window_bounds = array<i64: 8, 2>}, {pipeline_mode = #tpu.pipeline_mode<synchronous>, transform_indices = @transform_1, window_bounds = array<i64: 2, 512>}, {pipeline_mode = #tpu.pipeline_mode<synchronous>, transform_indices = @transform_2, window_bounds = array<i64: 4, 512>}, {pipeline_mode = #tpu.pipeline_mode<synchronous>, transform_indices = @transform_3, window_bounds = array<i64: 512, 1536>}, {transform_indices = @transform_4, window_bounds = array<i64: 8, 512>}]} {
    %c0 = arith.constant 0 : index
    %c0_0 = arith.constant 0 : index
    %0 = vector.load %arg1[%c0, %c0_0] : memref<8x2xf32, #tpu.memory_space<vmem>>, vector<8x2xf32>
    %1 = vector.extract_strided_slice %0 {offsets = [0, 0], sizes = [8, 1], strides = [1, 1]} : vector<8x2xf32> to vector<8x1xf32>
    %c0_1 = arith.constant 0 : index
    %c0_2 = arith.constant 0 : index
    %2 = vector.load %arg2[%c0_1, %c0_2] : memref<2x512xf32, #tpu.memory_space<vmem>>, vector<1x512xf32>
    %3 = vector.broadcast %1 : vector<8x1xf32> to vector<8x512xf32>
    %4 = vector.broadcast %2 : vector<1x512xf32> to vector<8x512xf32>
    %5 = arith.mulf %3, %4 : vector<8x512xf32>
    %6 = vector.extract_strided_slice %0 {offsets = [0, 1], sizes = [8, 1], strides = [1, 1]} : vector<8x2xf32> to vector<8x1xf32>
    %c1 = arith.constant 1 : index
    %c0_3 = arith.constant 0 : index
    %7 = vector.load %arg2[%c1, %c0_3] : memref<2x512xf32, #tpu.memory_space<vmem>>, vector<1x512xf32>
    %8 = vector.broadcast %6 : vector<8x1xf32> to vector<8x512xf32>
    %9 = vector.broadcast %7 : vector<1x512xf32> to vector<8x512xf32>
    %10 = arith.mulf %8, %9 : vector<8x512xf32>
    %11 = arith.addf %5, %10 : vector<8x512xf32>
    %c0_4 = arith.constant 0 : index
    %c0_5 = arith.constant 0 : index
    %12 = vector.load %arg3[%c0_4, %c0_5] : memref<4x512xf32, #tpu.memory_space<vmem>>, vector<1x512xf32>
    %13 = vector.broadcast %12 : vector<1x512xf32> to vector<8x512xf32>
    %14 = arith.addf %11, %13 : vector<8x512xf32>
    %cst = arith.constant 0.000000e+00 : f32
    %15 = vector.broadcast %cst : f32 to vector<8x512xf32>
    %16 = arith.cmpf ogt, %14, %15 : vector<8x512xf32>
    %cst_6 = arith.constant 2.000000e-01 : f32
    %17 = vector.broadcast %cst_6 : f32 to vector<8x512xf32>
    %18 = arith.mulf %17, %14 : vector<8x512xf32>
    %19 = arith.select %16, %14, %18 : vector<8x512xi1>, vector<8x512xf32>
    %c0_7 = arith.constant 0 : index
    %c0_8 = arith.constant 0 : index
    %20 = vector.load %arg4[%c0_7, %c0_8] : memref<512x1536xbf16, #tpu.memory_space<vmem>>, vector<512x512xbf16>
    %21 = arith.truncf %19 : vector<8x512xf32> to vector<8x512xbf16>
    %cst_9 = arith.constant dense<0.000000e+00> : vector<8x512xf32>
    %22 = tpu.matmul %21, %20, %cst_9 {dimension_numbers = #tpu.dot_dimension_numbers<[1], [0], [0], [1], [0, 0, 1, 1], [], []>} : vector<8x512xbf16>, vector<512x512xbf16>, vector<8x512xf32> -> vector<8x512xf32>
    %c1_10 = arith.constant 1 : index
    %c0_11 = arith.constant 0 : index
    %23 = vector.load %arg3[%c1_10, %c0_11] : memref<4x512xf32, #tpu.memory_space<vmem>>, vector<1x512xf32>
    %24 = vector.broadcast %23 : vector<1x512xf32> to vector<8x512xf32>
    %25 = arith.addf %22, %24 : vector<8x512xf32>
    %cst_12 = arith.constant 0.000000e+00 : f32
    %26 = vector.broadcast %cst_12 : f32 to vector<8x512xf32>
    %27 = arith.cmpf ogt, %25, %26 : vector<8x512xf32>
    %cst_13 = arith.constant 2.000000e-01 : f32
    %28 = vector.broadcast %cst_13 : f32 to vector<8x512xf32>
    %29 = arith.mulf %28, %25 : vector<8x512xf32>
    %30 = arith.select %27, %25, %29 : vector<8x512xi1>, vector<8x512xf32>
    %c0_14 = arith.constant 0 : index
    %c512 = arith.constant 512 : index
    %31 = vector.load %arg4[%c0_14, %c512] : memref<512x1536xbf16, #tpu.memory_space<vmem>>, vector<512x512xbf16>
    %32 = arith.truncf %30 : vector<8x512xf32> to vector<8x512xbf16>
    %cst_15 = arith.constant dense<0.000000e+00> : vector<8x512xf32>
    %33 = tpu.matmul %32, %31, %cst_15 {dimension_numbers = #tpu.dot_dimension_numbers<[1], [0], [0], [1], [0, 0, 1, 1], [], []>} : vector<8x512xbf16>, vector<512x512xbf16>, vector<8x512xf32> -> vector<8x512xf32>
    %c2 = arith.constant 2 : index
    %c0_16 = arith.constant 0 : index
    %34 = vector.load %arg3[%c2, %c0_16] : memref<4x512xf32, #tpu.memory_space<vmem>>, vector<1x512xf32>
    %35 = vector.broadcast %34 : vector<1x512xf32> to vector<8x512xf32>
    %36 = arith.addf %33, %35 : vector<8x512xf32>
    %cst_17 = arith.constant 0.000000e+00 : f32
    %37 = vector.broadcast %cst_17 : f32 to vector<8x512xf32>
    %38 = arith.cmpf ogt, %36, %37 : vector<8x512xf32>
    %cst_18 = arith.constant 2.000000e-01 : f32
    %39 = vector.broadcast %cst_18 : f32 to vector<8x512xf32>
    %40 = arith.mulf %39, %36 : vector<8x512xf32>
    %41 = arith.select %38, %36, %40 : vector<8x512xi1>, vector<8x512xf32>
    %c0_19 = arith.constant 0 : index
    %c1024 = arith.constant 1024 : index
    %42 = vector.load %arg4[%c0_19, %c1024] : memref<512x1536xbf16, #tpu.memory_space<vmem>>, vector<512x512xbf16>
    %43 = arith.truncf %41 : vector<8x512xf32> to vector<8x512xbf16>
    %cst_20 = arith.constant dense<0.000000e+00> : vector<8x512xf32>
    %44 = tpu.matmul %43, %42, %cst_20 {dimension_numbers = #tpu.dot_dimension_numbers<[1], [0], [0], [1], [0, 0, 1, 1], [], []>} : vector<8x512xbf16>, vector<512x512xbf16>, vector<8x512xf32> -> vector<8x512xf32>
    %c3 = arith.constant 3 : index
    %c0_21 = arith.constant 0 : index
    %45 = vector.load %arg3[%c3, %c0_21] : memref<4x512xf32, #tpu.memory_space<vmem>>, vector<1x512xf32>
    %46 = vector.broadcast %45 : vector<1x512xf32> to vector<8x512xf32>
    %47 = arith.addf %44, %46 : vector<8x512xf32>
    %c0_22 = arith.constant 0 : index
    %c0_23 = arith.constant 0 : index
    %48 = vector.load %arg5[%c0_22, %c0_23] : memref<8x512xf32, #tpu.memory_space<vmem>>, vector<8x512xf32>
    tpu.vector_store %arg5[%c0_22, %c0_23], %47 {strides = array<i32>} : memref<8x512xf32, #tpu.memory_space<vmem>>, vector<8x512xf32>,
    return
  }
  func.func @transform_0(%arg0: i32) -> (i32, i32) {
    %c0_i32 = arith.constant 0 : i32
    %c0_i32_0 = arith.constant 0 : i32
    return %arg0, %c0_i32 : i32, i32
  }
  func.func @transform_1(%arg0: i32) -> (i32, i32) {
    %c0_i32 = arith.constant 0 : i32
    %c0_i32_0 = arith.constant 0 : i32
    %c0_i32_1 = arith.constant 0 : i32
    return %c0_i32, %c0_i32_0 : i32, i32
  }
  func.func @transform_2(%arg0: i32) -> (i32, i32) {
    %c0_i32 = arith.constant 0 : i32
    %c0_i32_0 = arith.constant 0 : i32
    %c0_i32_1 = arith.constant 0 : i32
    return %c0_i32, %c0_i32_0 : i32, i32
  }
  func.func @transform_3(%arg0: i32) -> (i32, i32) {
    %c0_i32 = arith.constant 0 : i32
    %c0_i32_0 = arith.constant 0 : i32
    %c0_i32_1 = arith.constant 0 : i32
    return %c0_i32, %c0_i32_0 : i32, i32
  }
  func.func @transform_4(%arg0: i32) -> (i32, i32) {
    %c0_i32 = arith.constant 0 : i32
    %c0_i32_0 = arith.constant 0 : i32
    return %arg0, %c0_i32 : i32, i32
  }
}

</mosaic_0001>

<llo_original>
// kernel: control_mapping_network.1
$region0: #{control_mapping_network.1}
  #allocation0 [shape = 'u32[]', space=smem, size = 0x4, offset = 0x4, fixed_abs, tag = 'smem constant byte address 0x4 - core index']
  #allocation1 [shape = 'u32[144,128]{1,0:T(1,128)}', space=vmem, size = 0x12000, scoped, tag = 'internal scratch']
  %s0 = inlined_call_operand.vmem [shape: f32[8,2], index: 0, kind: input, shape index: {}]
  %s1 = inlined_call_operand.hbm [shape: f32[2,512], index: 1, kind: input, shape index: {}]
  %s2 = inlined_call_operand.hbm [shape: f32[4,512], index: 2, kind: input, shape index: {}]
  %s3 = inlined_call_operand.hbm [shape: bf16[512,1536], index: 3, kind: input, shape index: {}]
  %s4 = inlined_call_operand.hbm [shape: f32[8,512], index: 4, kind: output, shape index: {}]
  %s5 = sld [smem:[#allocation0]]
  $region38: #{control_mapping_network.1} parent=0
    _
  %s7 = ssub.s32 1, %s5
  %s8 = scalar_select 0, %s7, %s5
  $region1: #{control_mapping_network.1} parent=0
    #allocation2 [shape = 'u8[4096]{0}', space=vmem, size = 0x1000, scoped, tag = 'input window, operand 1, single buffered']
    #allocation3 [shape = 's32[1]{0}', space=sflag, size = 0x4, scoped, tag = 'scoped memory for control_mapping_network.1']
    #allocation4 [shape = 's32[1]{0}', space=sflag, size = 0x4, scoped, tag = 'scoped memory for control_mapping_network.1']
    #allocation5 [shape = 'u8[8192]{0}', space=vmem, size = 0x2000, scoped, tag = 'input window, operand 2, single buffered']
    #allocation6 [shape = 's32[1]{0}', space=sflag, size = 0x4, scoped, tag = 'scoped memory for control_mapping_network.1']
    #allocation7 [shape = 'u8[1572864]{0}', space=vmem, size = 0x180000, scoped, tag = 'input window, operand 3, single buffered']
    #allocation8 [shape = 'u8[16384]{0}', space=vmem, size = 0x4000, scoped, tag = 'output window, operand 0, single buffered']
    %9 = vsyncpa [#allocation3], 0
    %10 = vsyncpa [#allocation6], 0
    %11 = vsyncpa [#allocation4], 0
    // Predicated region
    $region2: #{control_mapping_network.1} parent=1 // pred_check
      _
    $region3: #{control_mapping_network.1} parent=1 // pred_check_branch
      %13 = sbr.rel (0) target = $region5
    $region4: #{control_mapping_network.1} parent=1 // pred_region
      _
    $region5: #{control_mapping_network.1} parent=1 // pred_fallthru
      _
    // Predicated region
    $region6: #{control_mapping_network.1} parent=1 // pred_check
      _
    $region7: #{control_mapping_network.1} parent=1 // pred_check_branch
      %15 = sbr.rel (0) target = $region9
    $region8: #{control_mapping_network.1} parent=1 // pred_region
      %s17 = ssub.s32 128, 128
      %18 = vsyncadd [#allocation3], %s17
      %s20 = sshll.u32 [#allocation2], 4
      %s21 = int_to_ptr.vmem [resolvable:$true] %s20
      %23 = dma.hbm_to_vmem [thread:$0]  %s1, 128, %s21, [#allocation3]
    $region9: #{control_mapping_network.1} parent=1 // pred_fallthru
      _
    // Predicated region
    $region10: #{control_mapping_network.1} parent=1 // pred_check
      _
    $region11: #{control_mapping_network.1} parent=1 // pred_check_branch
      %25 = sbr.rel (0) target = $region13
    $region12: #{control_mapping_network.1} parent=1 // pred_region
      %s27 = ssub.s32 256, 256
      %28 = vsyncadd [#allocation6], %s27
      %s30 = sshll.u32 [#allocation5], 4
      %s31 = int_to_ptr.vmem [resolvable:$true] %s30
      %33 = dma.hbm_to_vmem [thread:$0]  %s2, 256, %s31, [#allocation6]
    $region13: #{control_mapping_network.1} parent=1 // pred_fallthru
      _
    // Predicated region
    $region14: #{control_mapping_network.1} parent=1 // pred_check
      _
    $region15: #{control_mapping_network.1} parent=1 // pred_check_branch
      %35 = sbr.rel (0) target = $region17
    $region16: #{control_mapping_network.1} parent=1 // pred_region
      %s37 = ssub.s32 49152, 49152
      %38 = vsyncadd [#allocation6], %s37
      %s39 = sshll.u32 [#allocation7], 4
      %s40 = int_to_ptr.vmem [resolvable:$true] %s39
      %45 = dma.hbm_to_vmem [thread:$0]  %s3, 49152, %s40, [#allocation6], 768, 768, 48
    $region17: #{control_mapping_network.1} parent=1 // pred_fallthru
      _
    // Predicated region
    $region18: #{control_mapping_network.1} parent=1 // pred_check
      _
    $region19: #{control_mapping_network.1} parent=1 // pred_check_branch
      %47 = sbr.rel (0) target = $region21
    $region20: #{control_mapping_network.1} parent=1 // pred_region
      %48 = dma.done [#allocation3], 128
    $region21: #{control_mapping_network.1} parent=1 // pred_fallthru
      _
    // Predicated region
    $region22: #{control_mapping_network.1} parent=1 // pred_check
      _
    $region23: #{control_mapping_network.1} parent=1 // pred_check_branch
      %50 = sbr.rel (0) target = $region25
    $region24: #{control_mapping_network.1} parent=1 // pred_region
      %51 = dma.done [#allocation6], 256
    $region25: #{control_mapping_network.1} parent=1 // pred_fallthru
      _
    // Predicated region
    $region26: #{control_mapping_network.1} parent=1 // pred_check
      _
    $region27: #{control_mapping_network.1} parent=1 // pred_check_branch
      %53 = sbr.rel (0) target = $region29
    $region28: #{control_mapping_network.1} parent=1 // pred_region
      %54 = dma.done [#allocation6], 49152
    $region29: #{control_mapping_network.1} parent=1 // pred_fallthru
      _
    %v55 = vld [vmem:[%s0] sm:$0xff]
    %v56 = vld [vmem:[#allocation2] ss:$2 sm:$0xf]
    %58 = vset.pattern.permute.xlu0 0
    %59 = vperm.xlu0 %58, %v55
    %v60 = vpop.permute.xlu0 %59
    %v63 = vlaneseq
    %v64 = vshrl.u32 %v63, 7
    %v65 = vsub.s32 0, %v64
    %v66 = vrot.slane %v56, %v65
    %v67 = vlaneseq
    %v68 = vshrl.u32 %v67, 7
    %v69 = vsub.s32 1, %v68
    %v70 = vrot.slane %v56, %v69
    %v71 = vlaneseq
    %v72 = vshrl.u32 %v71, 7
    %v73 = vsub.s32 2, %v72
    %v74 = vrot.slane %v56, %v73
    %v75 = vlaneseq
    %v76 = vshrl.u32 %v75, 7
    %v77 = vsub.s32 3, %v76
    %v78 = vrot.slane %v56, %v77
    %v83 = vmul.f32 %v60, %v66
    %v84 = vmul.f32 %v60, %v70
    %v85 = vmul.f32 %v60, %v74
    %v86 = vmul.f32 %v60, %v78
    %s87 = scalar_lea.vmem [#allocation2], 1
    %v88 = vld [vmem:[%s87] ss:$2 sm:$0xf]
    %89 = vset.pattern.permute.xlu0 1
    %90 = vperm.xlu0 %89, %v55
    %v91 = vpop.permute.xlu0 %90
    %v94 = vlaneseq
    %v95 = vshrl.u32 %v94, 7
    %v96 = vsub.s32 0, %v95
    %v97 = vrot.slane %v88, %v96
    %v98 = vlaneseq
    %v99 = vshrl.u32 %v98, 7
    %v100 = vsub.s32 1, %v99
    %v101 = vrot.slane %v88, %v100
    %v102 = vlaneseq
    %v103 = vshrl.u32 %v102, 7
    %v104 = vsub.s32 2, %v103
    %v105 = vrot.slane %v88, %v104
    %v106 = vlaneseq
    %v107 = vshrl.u32 %v106, 7
    %v108 = vsub.s32 3, %v107
    %v109 = vrot.slane %v88, %v108
    %v114 = vmul.f32 %v91, %v97
    %v115 = vmul.f32 %v91, %v101
    %v116 = vmul.f32 %v91, %v105
    %v117 = vmul.f32 %v91, %v109
    %v118 = vadd.f32 %v83, %v114
    %v119 = vadd.f32 %v84, %v115
    %v120 = vadd.f32 %v85, %v116
    %v121 = vadd.f32 %v86, %v117
    %v122 = vld [vmem:[#allocation5] ss:$4 sm:$0xf]
    %v124 = vlaneseq
    %v125 = vshrl.u32 %v124, 7
    %v126 = vsub.s32 0, %v125
    %v127 = vrot.slane %v122, %v126
    %v128 = vlaneseq
    %v129 = vshrl.u32 %v128, 7
    %v130 = vsub.s32 1, %v129
    %v131 = vrot.slane %v122, %v130
    %v132 = vlaneseq
    %v133 = vshrl.u32 %v132, 7
    %v134 = vsub.s32 2, %v133
    %v135 = vrot.slane %v122, %v134
    %v136 = vlaneseq
    %v137 = vshrl.u32 %v136, 7
    %v138 = vsub.s32 3, %v137
    %v139 = vrot.slane %v122, %v138
    %v144 = vadd.f32 %v118, %v127
    %v145 = vadd.f32 %v119, %v131
    %v146 = vadd.f32 %v120, %v135
    %v147 = vadd.f32 %v121, %v139
    %vm148 = vcmp.gt.f32.partialorder %v144, 0.0
    %vm149 = vcmp.gt.f32.partialorder %v145, 0.0
    %vm150 = vcmp.gt.f32.partialorder %v146, 0.0
    %vm151 = vcmp.gt.f32.partialorder %v147, 0.0
    %v152 = vmul.f32 %v144, 0.2
    %v153 = vmul.f32 %v145, 0.2
    %v154 = vmul.f32 %v146, 0.2
    %v155 = vmul.f32 %v147, 0.2
    %v156 = vsel %vm148, %v144, %v152
    %v157 = vsel %vm149, %v145, %v153
    %v158 = vsel %vm150, %v146, %v154
    %v159 = vsel %vm151, %v147, %v155
    %v160 = vld [vmem:[#allocation7] sm:$0xff]
    %v161 = vld [vmem:[#allocation7 + $0x8] sm:$0xff]
    %v162 = vld [vmem:[#allocation7 + $0x30] sm:$0xff]
    %v163 = vld [vmem:[#allocation7 + $0x38] sm:$0xff]
    %v164 = vld [vmem:[#allocation7 + $0x60] sm:$0xff]
    %v165 = vld [vmem:[#allocation7 + $0x68] sm:$0xff]
    %v166 = vld [vmem:[#allocation7 + $0x90] sm:$0xff]
    %v167 = vld [vmem:[#allocation7 + $0x98] sm:$0xff]
    %v168 = vld [vmem:[#allocation7 + $0xc0] sm:$0xff]
    %v169 = vld [vmem:[#allocation7 + $0xc8] sm:$0xff]
    %v170 = vld [vmem:[#allocation7 + $0xf0] sm:$0xff]
    %v171 = vld [vmem:[#allocation7 + $0xf8] sm:$0xff]
    %v172 = vld [vmem:[#allocation7 + $0x120] sm:$0xff]
    %v173 = vld [vmem:[#allocation7 + $0x128] sm:$0xff]
    %v174 = vld [vmem:[#allocation7 + $0x150] sm:$0xff]
    %v175 = vld [vmem:[#allocation7 + $0x158] sm:$0xff]
    %v176 = vld [vmem:[#allocation7 + $0x180] sm:$0xff]
    %v177 = vld [vmem:[#allocation7 + $0x188] sm:$0xff]
    %v178 = vld [vmem:[#allocation7 + $0x1b0] sm:$0xff]
    %v179 = vld [vmem:[#allocation7 + $0x1b8] sm:$0xff]
    %v180 = vld [vmem:[#allocation7 + $0x1e0] sm:$0xff]
    %v181 = vld [vmem:[#allocation7 + $0x1e8] sm:$0xff]
    %v182 = vld [vmem:[#allocation7 + $0x210] sm:$0xff]
    %v183 = vld [vmem:[#allocation7 + $0x218] sm:$0xff]
    %v184 = vld [vmem:[#allocation7 + $0x240] sm:$0xff]
    %v185 = vld [vmem:[#allocation7 + $0x248] sm:$0xff]
    %v186 = vld [vmem:[#allocation7 + $0x270] sm:$0xff]
    %v187 = vld [vmem:[#allocation7 + $0x278] sm:$0xff]
    %v188 = vld [vmem:[#allocation7 + $0x2a0] sm:$0xff]
    %v189 = vld [vmem:[#allocation7 + $0x2a8] sm:$0xff]
    %v190 = vld [vmem:[#allocation7 + $0x2d0] sm:$0xff]
    %v191 = vld [vmem:[#allocation7 + $0x2d8] sm:$0xff]
    %v192 = vld [vmem:[#allocation7 + $0x300] sm:$0xff]
    %v193 = vld [vmem:[#allocation7 + $0x308] sm:$0xff]
    %v194 = vld [vmem:[#allocation7 + $0x330] sm:$0xff]
    %v195 = vld [vmem:[#allocation7 + $0x338] sm:$0xff]
    %v196 = vld [vmem:[#allocation7 + $0x360] sm:$0xff]
    %v197 = vld [vmem:[#allocation7 + $0x368] sm:$0xff]
    %v198 = vld [vmem:[#allocation7 + $0x390] sm:$0xff]
    %v199 = vld [vmem:[#allocation7 + $0x398] sm:$0xff]
    %v200 = vld [vmem:[#allocation7 + $0x3c0] sm:$0xff]
    %v201 = vld [vmem:[#allocation7 + $0x3c8] sm:$0xff]
    %v202 = vld [vmem:[#allocation7 + $0x3f0] sm:$0xff]
    %v203 = vld [vmem:[#allocation7 + $0x3f8] sm:$0xff]
    %v204 = vld [vmem:[#allocation7 + $0x420] sm:$0xff]
    %v205 = vld [vmem:[#allocation7 + $0x428] sm:$0xff]
    %v206 = vld [vmem:[#allocation7 + $0x450] sm:$0xff]
    %v207 = vld [vmem:[#allocation7 + $0x458] sm:$0xff]
    %v208 = vld [vmem:[#allocation7 + $0x480] sm:$0xff]
    %v209 = vld [vmem:[#allocation7 + $0x488] sm:$0xff]
    %v210 = vld [vmem:[#allocation7 + $0x4b0] sm:$0xff]
    %v211 = vld [vmem:[#allocation7 + $0x4b8] sm:$0xff]
    %v212 = vld [vmem:[#allocation7 + $0x4e0] sm:$0xff]
    %v213 = vld [vmem:[#allocation7 + $0x4e8] sm:$0xff]
    %v214 = vld [vmem:[#allocation7 + $0x510] sm:$0xff]
    %v215 = vld [vmem:[#allocation7 + $0x518] sm:$0xff]
    %v216 = vld [vmem:[#allocation7 + $0x540] sm:$0xff]
    %v217 = vld [vmem:[#allocation7 + $0x548] sm:$0xff]
    %v218 = vld [vmem:[#allocation7 + $0x570] sm:$0xff]
    %v219 = vld [vmem:[#allocation7 + $0x578] sm:$0xff]
    %v220 = vld [vmem:[#allocation7 + $0x5a0] sm:$0xff]
    %v221 = vld [vmem:[#allocation7 + $0x5a8] sm:$0xff]
    %v222 = vld [vmem:[#allocation7 + $0x5d0] sm:$0xff]
    %v223 = vld [vmem:[#allocation7 + $0x5d8] sm:$0xff]
    %v224 = vld [vmem:[#allocation7 + $0x600] sm:$0xff]
    %v225 = vld [vmem:[#allocation7 + $0x608] sm:$0xff]
    %v226 = vld [vmem:[#allocation7 + $0x630] sm:$0xff]
    %v227 = vld [vmem:[#allocation7 + $0x638] sm:$0xff]
    %v228 = vld [vmem:[#allocation7 + $0x660] sm:$0xff]
    %v229 = vld [vmem:[#allocation7 + $0x668] sm:$0xff]
    %v230 = vld [vmem:[#allocation7 + $0x690] sm:$0xff]
    %v231 = vld [vmem:[#allocation7 + $0x698] sm:$0xff]
    %v232 = vld [vmem:[#allocation7 + $0x6c0] sm:$0xff]
    %v233 = vld [vmem:[#allocation7 + $0x6c8] sm:$0xff]
    %v234 = vld [vmem:[#allocation7 + $0x6f0] sm:$0xff]
    %v235 = vld [vmem:[#allocation7 + $0x6f8] sm:$0xff]
    %v236 = vld [vmem:[#allocation7 + $0x720] sm:$0xff]
    %v237 = vld [vmem:[#allocation7 + $0x728] sm:$0xff]
    %v238 = vld [vmem:[#allocation7 + $0x750] sm:$0xff]
    %v239 = vld [vmem:[#allocation7 + $0x758] sm:$0xff]
    %v240 = vld [vmem:[#allocation7 + $0x780] sm:$0xff]
    %v241 = vld [vmem:[#allocation7 + $0x788] sm:$0xff]
    %v242 = vld [vmem:[#allocation7 + $0x7b0] sm:$0xff]
    %v243 = vld [vmem:[#allocation7 + $0x7b8] sm:$0xff]
    %v244 = vld [vmem:[#allocation7 + $0x7e0] sm:$0xff]
    %v245 = vld [vmem:[#allocation7 + $0x7e8] sm:$0xff]
    %v246 = vld [vmem:[#allocation7 + $0x810] sm:$0xff]
    %v247 = vld [vmem:[#allocation7 + $0x818] sm:$0xff]
    %v248 = vld [vmem:[#allocation7 + $0x840] sm:$0xff]
    %v249 = vld [vmem:[#allocation7 + $0x848] sm:$0xff]
    %v250 = vld [vmem:[#allocation7 + $0x870] sm:$0xff]
    %v251 = vld [vmem:[#allocation7 + $0x878] sm:$0xff]
    %v252 = vld [vmem:[#allocation7 + $0x8a0] sm:$0xff]
    %v253 = vld [vmem:[#allocation7 + $0x8a8] sm:$0xff]
    %v254 = vld [vmem:[#allocation7 + $0x8d0] sm:$0xff]
    %v255 = vld [vmem:[#allocation7 + $0x8d8] sm:$0xff]
    %v256 = vld [vmem:[#allocation7 + $0x900] sm:$0xff]
    %v257 = vld [vmem:[#allocation7 + $0x908] sm:$0xff]
    %v258 = vld [vmem:[#allocation7 + $0x930] sm:$0xff]
    %v259 = vld [vmem:[#allocation7 + $0x938] sm:$0xff]
    %v260 = vld [vmem:[#allocation7 + $0x960] sm:$0xff]
    %v261 = vld [vmem:[#allocation7 + $0x968] sm:$0xff]
    %v262 = vld [vmem:[#allocation7 + $0x990] sm:$0xff]
    %v263 = vld [vmem:[#allocation7 + $0x998] sm:$0xff]
    %v264 = vld [vmem:[#allocation7 + $0x9c0] sm:$0xff]
    %v265 = vld [vmem:[#allocation7 + $0x9c8] sm:$0xff]
    %v266 = vld [vmem:[#allocation7 + $0x9f0] sm:$0xff]
    %v267 = vld [vmem:[#allocation7 + $0x9f8] sm:$0xff]
    %v268 = vld [vmem:[#allocation7 + $0xa20] sm:$0xff]
    %v269 = vld [vmem:[#allocation7 + $0xa28] sm:$0xff]
    %v270 = vld [vmem:[#allocation7 + $0xa50] sm:$0xff]
    %v271 = vld [vmem:[#allocation7 + $0xa58] sm:$0xff]
    %v272 = vld [vmem:[#allocation7 + $0xa80] sm:$0xff]
    %v273 = vld [vmem:[#allocation7 + $0xa88] sm:$0xff]
    %v274 = vld [vmem:[#allocation7 + $0xab0] sm:$0xff]
    %v275 = vld [vmem:[#allocation7 + $0xab8] sm:$0xff]
    %v276 = vld [vmem:[#allocation7 + $0xae0] sm:$0xff]
    %v277 = vld [vmem:[#allocation7 + $0xae8] sm:$0xff]
    %v278 = vld [vmem:[#allocation7 + $0xb10] sm:$0xff]
    %v279 = vld [vmem:[#allocation7 + $0xb18] sm:$0xff]
    %v280 = vld [vmem:[#allocation7 + $0xb40] sm:$0xff]
    %v281 = vld [vmem:[#allocation7 + $0xb48] sm:$0xff]
    %v282 = vld [vmem:[#allocation7 + $0xb70] sm:$0xff]
    %v283 = vld [vmem:[#allocation7 + $0xb78] sm:$0xff]
    %v284 = vld [vmem:[#allocation7 + $0xba0] sm:$0xff]
    %v285 = vld [vmem:[#allocation7 + $0xba8] sm:$0xff]
    %v286 = vld [vmem:[#allocation7 + $0xbd0] sm:$0xff]
    %v287 = vld [vmem:[#allocation7 + $0xbd8] sm:$0xff]
    %v288 = vpack.c.bf16 %v156, %v156
    %v289 = vpack.c.bf16 %v157, %v157
    %v290 = vpack.c.bf16 %v158, %v158
    %v291 = vpack.c.bf16 %v159, %v159
    %s292 = scalar_lea.vmem [#allocation5], 1
    %v293 = vld [vmem:[%s292] ss:$4 sm:$0xf]
    %v295 = vlaneseq
    %v296 = vshrl.u32 %v295, 7
    %v297 = vsub.s32 0, %v296
    %v298 = vrot.slane %v293, %v297
    %v299 = vlaneseq
    %v300 = vshrl.u32 %v299, 7
    %v301 = vsub.s32 1, %v300
    %v302 = vrot.slane %v293, %v301
    %v303 = vlaneseq
    %v304 = vshrl.u32 %v303, 7
    %v305 = vsub.s32 2, %v304
    %v306 = vrot.slane %v293, %v305
    %v307 = vlaneseq
    %v308 = vshrl.u32 %v307, 7
    %v309 = vsub.s32 3, %v308
    %v310 = vrot.slane %v293, %v309
    %v443 = vunpack.c.l.b16 %v160
    %v444 = vunpack.c.h.b16 %v160
    %v445 = vunpack.c.l.b16 %v161
    %v446 = vunpack.c.h.b16 %v161
    %v447 = vunpack.c.l.b16 %v162
    %v448 = vunpack.c.h.b16 %v162
    %v449 = vunpack.c.l.b16 %v163
    %v450 = vunpack.c.h.b16 %v163
    %v451 = vunpack.c.l.b16 %v164
    %v452 = vunpack.c.h.b16 %v164
    %v453 = vunpack.c.l.b16 %v165
    %v454 = vunpack.c.h.b16 %v165
    %v455 = vunpack.c.l.b16 %v166
    %v456 = vunpack.c.h.b16 %v166
    %v457 = vunpack.c.l.b16 %v167
    %v458 = vunpack.c.h.b16 %v167
    %v459 = vunpack.c.l.b16 %v168
    %v460 = vunpack.c.h.b16 %v168
    %v461 = vunpack.c.l.b16 %v169
    %v462 = vunpack.c.h.b16 %v169
    %v463 = vunpack.c.l.b16 %v170
    %v464 = vunpack.c.h.b16 %v170
    %v465 = vunpack.c.l.b16 %v171
    %v466 = vunpack.c.h.b16 %v171
    %v467 = vunpack.c.l.b16 %v172
    %v468 = vunpack.c.h.b16 %v172
    %v469 = vunpack.c.l.b16 %v173
    %v470 = vunpack.c.h.b16 %v173
    %v471 = vunpack.c.l.b16 %v174
    %v472 = vunpack.c.h.b16 %v174
    %v473 = vunpack.c.l.b16 %v175
    %v474 = vunpack.c.h.b16 %v175
    %v475 = vunpack.c.l.b16 %v176
    %v476 = vunpack.c.h.b16 %v176
    %v477 = vunpack.c.l.b16 %v177
    %v478 = vunpack.c.h.b16 %v177
    %v479 = vunpack.c.l.b16 %v178
    %v480 = vunpack.c.h.b16 %v178
    %v481 = vunpack.c.l.b16 %v179
    %v482 = vunpack.c.h.b16 %v179
    %v483 = vunpack.c.l.b16 %v180
    %v484 = vunpack.c.h.b16 %v180
    %v485 = vunpack.c.l.b16 %v181
    %v486 = vunpack.c.h.b16 %v181
    %v487 = vunpack.c.l.b16 %v182
    %v488 = vunpack.c.h.b16 %v182
    %v489 = vunpack.c.l.b16 %v183
    %v490 = vunpack.c.h.b16 %v183
    %v491 = vunpack.c.l.b16 %v184
    %v492 = vunpack.c.h.b16 %v184
    %v493 = vunpack.c.l.b16 %v185
    %v494 = vunpack.c.h.b16 %v185
    %v495 = vunpack.c.l.b16 %v186
    %v496 = vunpack.c.h.b16 %v186
    %v497 = vunpack.c.l.b16 %v187
    %v498 = vunpack.c.h.b16 %v187
    %v499 = vunpack.c.l.b16 %v188
    %v500 = vunpack.c.h.b16 %v188
    %v501 = vunpack.c.l.b16 %v189
    %v502 = vunpack.c.h.b16 %v189
    %v503 = vunpack.c.l.b16 %v190
    %v504 = vunpack.c.h.b16 %v190
    %v505 = vunpack.c.l.b16 %v191
    %v506 = vunpack.c.h.b16 %v191
    %v507 = vunpack.c.l.b16 %v192
    %v508 = vunpack.c.h.b16 %v192
    %v509 = vunpack.c.l.b16 %v193
    %v510 = vunpack.c.h.b16 %v193
    %v511 = vunpack.c.l.b16 %v194
    %v512 = vunpack.c.h.b16 %v194
    %v513 = vunpack.c.l.b16 %v195
    %v514 = vunpack.c.h.b16 %v195
    %v515 = vunpack.c.l.b16 %v196
    %v516 = vunpack.c.h.b16 %v196
    %v517 = vunpack.c.l.b16 %v197
    %v518 = vunpack.c.h.b16 %v197
    %v519 = vunpack.c.l.b16 %v198
    %v520 = vunpack.c.h.b16 %v198
    %v521 = vunpack.c.l.b16 %v199
    %v522 = vunpack.c.h.b16 %v199
    %v523 = vunpack.c.l.b16 %v200
    %v524 = vunpack.c.h.b16 %v200
    %v525 = vunpack.c.l.b16 %v201
    %v526 = vunpack.c.h.b16 %v201
    %v527 = vunpack.c.l.b16 %v202
    %v528 = vunpack.c.h.b16 %v202
    %v529 = vunpack.c.l.b16 %v203
    %v530 = vunpack.c.h.b16 %v203
    %v531 = vunpack.c.l.b16 %v204
    %v532 = vunpack.c.h.b16 %v204
    %v533 = vunpack.c.l.b16 %v205
    %v534 = vunpack.c.h.b16 %v205
    %v535 = vunpack.c.l.b16 %v206
    %v536 = vunpack.c.h.b16 %v206
    %v537 = vunpack.c.l.b16 %v207
    %v538 = vunpack.c.h.b16 %v207
    %v539 = vunpack.c.l.b16 %v208
    %v540 = vunpack.c.h.b16 %v208
    %v541 = vunpack.c.l.b16 %v209
    %v542 = vunpack.c.h.b16 %v209
    %v543 = vunpack.c.l.b16 %v210
    %v544 = vunpack.c.h.b16 %v210
    %v545 = vunpack.c.l.b16 %v211
    %v546 = vunpack.c.h.b16 %v211
    %v547 = vunpack.c.l.b16 %v212
    %v548 = vunpack.c.h.b16 %v212
    %v549 = vunpack.c.l.b16 %v213
    %v550 = vunpack.c.h.b16 %v213
    %v551 = vunpack.c.l.b16 %v214
    %v552 = vunpack.c.h.b16 %v214
    %v553 = vunpack.c.l.b16 %v215
    %v554 = vunpack.c.h.b16 %v215
    %v555 = vunpack.c.l.b16 %v216
    %v556 = vunpack.c.h.b16 %v216
    %v557 = vunpack.c.l.b16 %v217
    %v558 = vunpack.c.h.b16 %v217
    %v559 = vunpack.c.l.b16 %v218
    %v560 = vunpack.c.h.b16 %v218
    %v561 = vunpack.c.l.b16 %v219
    %v562 = vunpack.c.h.b16 %v219
    %v563 = vunpack.c.l.b16 %v220
    %v564 = vunpack.c.h.b16 %v220
    %v565 = vunpack.c.l.b16 %v221
    %v566 = vunpack.c.h.b16 %v221
    %v567 = vunpack.c.l.b16 %v222
    %v568 = vunpack.c.h.b16 %v222
    %v569 = vunpack.c.l.b16 %v223
    %v570 = vunpack.c.h.b16 %v223
    %v571 = vunpack.c.l.b16 %v224
    %v572 = vunpack.c.h.b16 %v224
    %v573 = vunpack.c.l.b16 %v225
    %v574 = vunpack.c.h.b16 %v225
    %v575 = vunpack.c.l.b16 %v226
    %v576 = vunpack.c.h.b16 %v226
    %v577 = vunpack.c.l.b16 %v227
    %v578 = vunpack.c.h.b16 %v227
    %v579 = vunpack.c.l.b16 %v228
    %v580 = vunpack.c.h.b16 %v228
    %v581 = vunpack.c.l.b16 %v229
    %v582 = vunpack.c.h.b16 %v229
    %v583 = vunpack.c.l.b16 %v230
    %v584 = vunpack.c.h.b16 %v230
    %v585 = vunpack.c.l.b16 %v231
    %v586 = vunpack.c.h.b16 %v231
    %v587 = vunpack.c.l.b16 %v232
    %v588 = vunpack.c.h.b16 %v232
    %v589 = vunpack.c.l.b16 %v233
    %v590 = vunpack.c.h.b16 %v233
    %v591 = vunpack.c.l.b16 %v234
    %v592 = vunpack.c.h.b16 %v234
    %v593 = vunpack.c.l.b16 %v235
    %v594 = vunpack.c.h.b16 %v235
    %v595 = vunpack.c.l.b16 %v236
    %v596 = vunpack.c.h.b16 %v236
    %v597 = vunpack.c.l.b16 %v237
    %v598 = vunpack.c.h.b16 %v237
    %v599 = vunpack.c.l.b16 %v238
    %v600 = vunpack.c.h.b16 %v238
    %v601 = vunpack.c.l.b16 %v239
    %v602 = vunpack.c.h.b16 %v239
    %v603 = vunpack.c.l.b16 %v240
    %v604 = vunpack.c.h.b16 %v240
    %v605 = vunpack.c.l.b16 %v241
    %v606 = vunpack.c.h.b16 %v241
    %v607 = vunpack.c.l.b16 %v242
    %v608 = vunpack.c.h.b16 %v242
    %v609 = vunpack.c.l.b16 %v243
    %v610 = vunpack.c.h.b16 %v243
    %v611 = vunpack.c.l.b16 %v244
    %v612 = vunpack.c.h.b16 %v244
    %v613 = vunpack.c.l.b16 %v245
    %v614 = vunpack.c.h.b16 %v245
    %v615 = vunpack.c.l.b16 %v246
    %v616 = vunpack.c.h.b16 %v246
    %v617 = vunpack.c.l.b16 %v247
    %v618 = vunpack.c.h.b16 %v247
    %v619 = vunpack.c.l.b16 %v248
    %v620 = vunpack.c.h.b16 %v248
    %v621 = vunpack.c.l.b16 %v249
    %v622 = vunpack.c.h.b16 %v249
    %v623 = vunpack.c.l.b16 %v250
    %v624 = vunpack.c.h.b16 %v250
    %v625 = vunpack.c.l.b16 %v251
    %v626 = vunpack.c.h.b16 %v251
    %v627 = vunpack.c.l.b16 %v252
    %v628 = vunpack.c.h.b16 %v252
    %v629 = vunpack.c.l.b16 %v253
    %v630 = vunpack.c.h.b16 %v253
    %v631 = vunpack.c.l.b16 %v254
    %v632 = vunpack.c.h.b16 %v254
    %v633 = vunpack.c.l.b16 %v255
    %v634 = vunpack.c.h.b16 %v255
    %v635 = vunpack.c.l.b16 %v256
    %v636 = vunpack.c.h.b16 %v256
    %v637 = vunpack.c.l.b16 %v257
    %v638 = vunpack.c.h.b16 %v257
    %v639 = vunpack.c.l.b16 %v258
    %v640 = vunpack.c.h.b16 %v258
    %v641 = vunpack.c.l.b16 %v259
    %v642 = vunpack.c.h.b16 %v259
    %v643 = vunpack.c.l.b16 %v260
    %v644 = vunpack.c.h.b16 %v260
    %v645 = vunpack.c.l.b16 %v261
    %v646 = vunpack.c.h.b16 %v261
    %v647 = vunpack.c.l.b16 %v262
    %v648 = vunpack.c.h.b16 %v262
    %v649 = vunpack.c.l.b16 %v263
    %v650 = vunpack.c.h.b16 %v263
    %v651 = vunpack.c.l.b16 %v264
    %v652 = vunpack.c.h.b16 %v264
    %v653 = vunpack.c.l.b16 %v265
    %v654 = vunpack.c.h.b16 %v265
    %v655 = vunpack.c.l.b16 %v266
    %v656 = vunpack.c.h.b16 %v266
    %v657 = vunpack.c.l.b16 %v267
    %v658 = vunpack.c.h.b16 %v267
    %v659 = vunpack.c.l.b16 %v268
    %v660 = vunpack.c.h.b16 %v268
    %v661 = vunpack.c.l.b16 %v269
    %v662 = vunpack.c.h.b16 %v269
    %v663 = vunpack.c.l.b16 %v270
    %v664 = vunpack.c.h.b16 %v270
    %v665 = vunpack.c.l.b16 %v271
    %v666 = vunpack.c.h.b16 %v271
    %v667 = vunpack.c.l.b16 %v272
    %v668 = vunpack.c.h.b16 %v272
    %v669 = vunpack.c.l.b16 %v273
    %v670 = vunpack.c.h.b16 %v273
    %v671 = vunpack.c.l.b16 %v274
    %v672 = vunpack.c.h.b16 %v274
    %v673 = vunpack.c.l.b16 %v275
    %v674 = vunpack.c.h.b16 %v275
    %v675 = vunpack.c.l.b16 %v276
    %v676 = vunpack.c.h.b16 %v276
    %v677 = vunpack.c.l.b16 %v277
    %v678 = vunpack.c.h.b16 %v277
    %v679 = vunpack.c.l.b16 %v278
    %v680 = vunpack.c.h.b16 %v278
    %v681 = vunpack.c.l.b16 %v279
    %v682 = vunpack.c.h.b16 %v279
    %v683 = vunpack.c.l.b16 %v280
    %v684 = vunpack.c.h.b16 %v280
    %v685 = vunpack.c.l.b16 %v281
    %v686 = vunpack.c.h.b16 %v281
    %v687 = vunpack.c.l.b16 %v282
    %v688 = vunpack.c.h.b16 %v282
    %v689 = vunpack.c.l.b16 %v283
    %v690 = vunpack.c.h.b16 %v283
    %v691 = vunpack.c.l.b16 %v284
    %v692 = vunpack.c.h.b16 %v284
    %v693 = vunpack.c.l.b16 %v285
    %v694 = vunpack.c.h.b16 %v285
    %v695 = vunpack.c.l.b16 %v286
    %v696 = vunpack.c.h.b16 %v286
    %v697 = vunpack.c.l.b16 %v287
    %v698 = vunpack.c.h.b16 %v287
    %v699 = vpack.c.b16 %v447, %v443
    %v700 = vpack.c.b16 %v448, %v444
    %v701 = vpack.c.b16 %v449, %v445
    %v702 = vpack.c.b16 %v450, %v446
    %v703 = vpack.c.b16 %v455, %v451
    %v704 = vpack.c.b16 %v456, %v452
    %v705 = vpack.c.b16 %v457, %v453
    %v706 = vpack.c.b16 %v458, %v454
    %v707 = vpack.c.b16 %v463, %v459
    %v708 = vpack.c.b16 %v464, %v460
    %v709 = vpack.c.b16 %v465, %v461
    %v710 = vpack.c.b16 %v466, %v462
    %v711 = vpack.c.b16 %v471, %v467
    %v712 = vpack.c.b16 %v472, %v468
    %v713 = vpack.c.b16 %v473, %v469
    %v714 = vpack.c.b16 %v474, %v470
    %v715 = vpack.c.b16 %v479, %v475
    %v716 = vpack.c.b16 %v480, %v476
    %v717 = vpack.c.b16 %v481, %v477
    %v718 = vpack.c.b16 %v482, %v478
    %v719 = vpack.c.b16 %v487, %v483
    %v720 = vpack.c.b16 %v488, %v484
    %v721 = vpack.c.b16 %v489, %v485
    %v722 = vpack.c.b16 %v490, %v486
    %v723 = vpack.c.b16 %v495, %v491
    %v724 = vpack.c.b16 %v496, %v492
    %v725 = vpack.c.b16 %v497, %v493
    %v726 = vpack.c.b16 %v498, %v494
    %v727 = vpack.c.b16 %v503, %v499
    %v728 = vpack.c.b16 %v504, %v500
    %v729 = vpack.c.b16 %v505, %v501
    %v730 = vpack.c.b16 %v506, %v502
    %v731 = vpack.c.b16 %v511, %v507
    %v732 = vpack.c.b16 %v512, %v508
    %v733 = vpack.c.b16 %v513, %v509
    %v734 = vpack.c.b16 %v514, %v510
    %v735 = vpack.c.b16 %v519, %v515
    %v736 = vpack.c.b16 %v520, %v516
    %v737 = vpack.c.b16 %v521, %v517
    %v738 = vpack.c.b16 %v522, %v518
    %v739 = vpack.c.b16 %v527, %v523
    %v740 = vpack.c.b16 %v528, %v524
    %v741 = vpack.c.b16 %v529, %v525
    %v742 = vpack.c.b16 %v530, %v526
    %v743 = vpack.c.b16 %v535, %v531
    %v744 = vpack.c.b16 %v536, %v532
    %v745 = vpack.c.b16 %v537, %v533
    %v746 = vpack.c.b16 %v538, %v534
    %v747 = vpack.c.b16 %v543, %v539
    %v748 = vpack.c.b16 %v544, %v540
    %v749 = vpack.c.b16 %v545, %v541
    %v750 = vpack.c.b16 %v546, %v542
    %v751 = vpack.c.b16 %v551, %v547
    %v752 = vpack.c.b16 %v552, %v548
    %v753 = vpack.c.b16 %v553, %v549
    %v754 = vpack.c.b16 %v554, %v550
    %v755 = vpack.c.b16 %v559, %v555
    %v756 = vpack.c.b16 %v560, %v556
    %v757 = vpack.c.b16 %v561, %v557
    %v758 = vpack.c.b16 %v562, %v558
    %v759 = vpack.c.b16 %v567, %v563
    %v760 = vpack.c.b16 %v568, %v564
    %v761 = vpack.c.b16 %v569, %v565
    %v762 = vpack.c.b16 %v570, %v566
    %v763 = vpack.c.b16 %v575, %v571
    %v764 = vpack.c.b16 %v576, %v572
    %v765 = vpack.c.b16 %v577, %v573
    %v766 = vpack.c.b16 %v578, %v574
    %v767 = vpack.c.b16 %v583, %v579
    %v768 = vpack.c.b16 %v584, %v580
    %v769 = vpack.c.b16 %v585, %v581
    %v770 = vpack.c.b16 %v586, %v582
    %v771 = vpack.c.b16 %v591, %v587
    %v772 = vpack.c.b16 %v592, %v588
    %v773 = vpack.c.b16 %v593, %v589
    %v774 = vpack.c.b16 %v594, %v590
    %v775 = vpack.c.b16 %v599, %v595
    %v776 = vpack.c.b16 %v600, %v596
    %v777 = vpack.c.b16 %v601, %v597
    %v778 = vpack.c.b16 %v602, %v598
    %v779 = vpack.c.b16 %v607, %v603
    %v780 = vpack.c.b16 %v608, %v604
    %v781 = vpack.c.b16 %v609, %v605
    %v782 = vpack.c.b16 %v610, %v606
    %v783 = vpack.c.b16 %v615, %v611
    %v784 = vpack.c.b16 %v616, %v612
    %v785 = vpack.c.b16 %v617, %v613
    %v786 = vpack.c.b16 %v618, %v614
    %v787 = vpack.c.b16 %v623, %v619
    %v788 = vpack.c.b16 %v624, %v620
    %v789 = vpack.c.b16 %v625, %v621
    %v790 = vpack.c.b16 %v626, %v622
    %v791 = vpack.c.b16 %v631, %v627
    %v792 = vpack.c.b16 %v632, %v628
    %v793 = vpack.c.b16 %v633, %v629
    %v794 = vpack.c.b16 %v634, %v630
    %v795 = vpack.c.b16 %v639, %v635
    %v796 = vpack.c.b16 %v640, %v636
    %v797 = vpack.c.b16 %v641, %v637
    %v798 = vpack.c.b16 %v642, %v638
    %v799 = vpack.c.b16 %v647, %v643
    %v800 = vpack.c.b16 %v648, %v644
    %v801 = vpack.c.b16 %v649, %v645
    %v802 = vpack.c.b16 %v650, %v646
    %v803 = vpack.c.b16 %v655, %v651
    %v804 = vpack.c.b16 %v656, %v652
    %v805 = vpack.c.b16 %v657, %v653
    %v806 = vpack.c.b16 %v658, %v654
    %v807 = vpack.c.b16 %v663, %v659
    %v808 = vpack.c.b16 %v664, %v660
    %v809 = vpack.c.b16 %v665, %v661
    %v810 = vpack.c.b16 %v666, %v662
    %v811 = vpack.c.b16 %v671, %v667
    %v812 = vpack.c.b16 %v672, %v668
    %v813 = vpack.c.b16 %v673, %v669
    %v814 = vpack.c.b16 %v674, %v670
    %v815 = vpack.c.b16 %v679, %v675
    %v816 = vpack.c.b16 %v680, %v676
    %v817 = vpack.c.b16 %v681, %v677
    %v818 = vpack.c.b16 %v682, %v678
    %v819 = vpack.c.b16 %v687, %v683
    %v820 = vpack.c.b16 %v688, %v684
    %v821 = vpack.c.b16 %v689, %v685
    %v822 = vpack.c.b16 %v690, %v686
    %v823 = vpack.c.b16 %v695, %v691
    %v824 = vpack.c.b16 %v696, %v692
    %v825 = vpack.c.b16 %v697, %v693
    %v826 = vpack.c.b16 %v698, %v694
    %955 = vmatprep.subr.bf16.mxu0 %v700
    %956 = vmatpush1.bf16.msra.mxu0 %v699
    %957 = vmatprep.subr.bf16.mxu0 %v704
    %958 = vmatpush1.bf16.msra.mxu0 %v703
    %959 = vmatprep.subr.bf16.mxu0 %v708
    %960 = vmatpush1.bf16.msra.mxu0 %v707
    %961 = vmatprep.subr.bf16.mxu0 %v712
    %962 = vmatpush1.bf16.msra.mxu0 %v711
    %963 = vmatprep.subr.bf16.mxu0 %v716
    %964 = vmatpush1.bf16.msra.mxu0 %v715
    %965 = vmatprep.subr.bf16.mxu0 %v720
    %966 = vmatpush1.bf16.msra.mxu0 %v719
    %967 = vmatprep.subr.bf16.mxu0 %v724
    %968 = vmatpush1.bf16.msra.mxu0 %v723
    %969 = vmatprep.subr.bf16.mxu0 %v728
    %970 = vmatpush1.bf16.msra.mxu0 %v727
    %971 = vmatprep.subr.bf16.mxu0 %v732
    %972 = vmatpush1.bf16.msra.mxu0 %v731
    %973 = vmatprep.subr.bf16.mxu0 %v736
    %974 = vmatpush1.bf16.msra.mxu0 %v735
    %975 = vmatprep.subr.bf16.mxu0 %v740
    %976 = vmatpush1.bf16.msra.mxu0 %v739
    %977 = vmatprep.subr.bf16.mxu0 %v744
    %978 = vmatpush1.bf16.msra.mxu0 %v743
    %979 = vmatprep.subr.bf16.mxu0 %v748
    %980 = vmatpush1.bf16.msra.mxu0 %v747
    %981 = vmatprep.subr.bf16.mxu0 %v752
    %982 = vmatpush1.bf16.msra.mxu0 %v751
    %983 = vmatprep.subr.bf16.mxu0 %v756
    %984 = vmatpush1.bf16.msra.mxu0 %v755
    %985 = vmatprep.subr.bf16.mxu0 %v760
    %986 = vmatpush1.bf16.msra.mxu0 %v759
    %987 = vmatprep.mubr.bf16.mxu0 %v289
    %988 = vmatmul.mubr.bf16.gmra.mrb[0].mxu0 %v288
    %v989 = vpop.f32.mrb[0].mxu0
    %v990 = vadd.f32 %v298, %v989
    %v991 = vpop.f32.mrb[0].mxu0
    %v992 = vadd.f32 %v302, %v991
    %v993 = vpop.f32.mrb[0].mxu0
    %v994 = vpop.f32.mrb[0].mxu0
    %995 = vdwg.mxu0
    %996 = vmatprep.subr.bf16.mxu0 %v764
    %997 = vmatpush1.bf16.msra.mxu0 %v763
    %998 = vmatprep.subr.bf16.mxu0 %v768
    %999 = vmatpush1.bf16.msra.mxu0 %v767
    %1000 = vmatprep.subr.bf16.mxu0 %v772
    %1001 = vmatpush1.bf16.msra.mxu0 %v771
    %1002 = vmatprep.subr.bf16.mxu0 %v776
    %1003 = vmatpush1.bf16.msra.mxu0 %v775
    %1004 = vmatprep.subr.bf16.mxu0 %v780
    %1005 = vmatpush1.bf16.msra.mxu0 %v779
    %1006 = vmatprep.subr.bf16.mxu0 %v784
    %1007 = vmatpush1.bf16.msra.mxu0 %v783
    %1008 = vmatprep.subr.bf16.mxu0 %v788
    %1009 = vmatpush1.bf16.msra.mxu0 %v787
    %1010 = vmatprep.subr.bf16.mxu0 %v792
    %1011 = vmatpush1.bf16.msra.mxu0 %v791
    %1012 = vmatprep.subr.bf16.mxu0 %v796
    %1013 = vmatpush1.bf16.msra.mxu0 %v795
    %1014 = vmatprep.subr.bf16.mxu0 %v800
    %1015 = vmatpush1.bf16.msra.mxu0 %v799
    %1016 = vmatprep.subr.bf16.mxu0 %v804
    %1017 = vmatpush1.bf16.msra.mxu0 %v803
    %1018 = vmatprep.subr.bf16.mxu0 %v808
    %1019 = vmatpush1.bf16.msra.mxu0 %v807
    %1020 = vmatprep.subr.bf16.mxu0 %v812
    %1021 = vmatpush1.bf16.msra.mxu0 %v811
    %1022 = vmatprep.subr.bf16.mxu0 %v816
    %1023 = vmatpush1.bf16.msra.mxu0 %v815
    %1024 = vmatprep.subr.bf16.mxu0 %v820
    %1025 = vmatpush1.bf16.msra.mxu0 %v819
    %1026 = vmatprep.subr.bf16.mxu0 %v824
    %1027 = vmatpush1.bf16.msra.mxu0 %v823
    %1028 = vmatprep.mubr.bf16.mxu0 %v291
    %1029 = vmatmul.mubr.bf16.gmra.mrb[0].mxu0 %v290
    %v1030 = vpop.f32.mrb[0].mxu0
    %v1031 = vadd.f32 %v990, %v1030
    %v1032 = vpop.f32.mrb[0].mxu0
    %v1033 = vadd.f32 %v992, %v1032
    %v1034 = vpop.f32.mrb[0].mxu0
    %v1035 = vpop.f32.mrb[0].mxu0
    %1036 = vdwg.mxu0
    %1037 = vmatprep.subr.bf16.mxu0 %v702
    %1038 = vmatpush1.bf16.msra.mxu0 %v701
    %1039 = vmatprep.subr.bf16.mxu0 %v706
    %1040 = vmatpush1.bf16.msra.mxu0 %v705
    %1041 = vmatprep.subr.bf16.mxu0 %v710
    %1042 = vmatpush1.bf16.msra.mxu0 %v709
    %1043 = vmatprep.subr.bf16.mxu0 %v714
    %1044 = vmatpush1.bf16.msra.mxu0 %v713
    %1045 = vmatprep.subr.bf16.mxu0 %v718
    %1046 = vmatpush1.bf16.msra.mxu0 %v717
    %1047 = vmatprep.subr.bf16.mxu0 %v722
    %1048 = vmatpush1.bf16.msra.mxu0 %v721
    %1049 = vmatprep.subr.bf16.mxu0 %v726
    %1050 = vmatpush1.bf16.msra.mxu0 %v725
    %1051 = vmatprep.subr.bf16.mxu0 %v730
    %1052 = vmatpush1.bf16.msra.mxu0 %v729
    %1053 = vmatprep.subr.bf16.mxu0 %v734
    %1054 = vmatpush1.bf16.msra.mxu0 %v733
    %1055 = vmatprep.subr.bf16.mxu0 %v738
    %1056 = vmatpush1.bf16.msra.mxu0 %v737
    %1057 = vmatprep.subr.bf16.mxu0 %v742
    %1058 = vmatpush1.bf16.msra.mxu0 %v741
    %1059 = vmatprep.subr.bf16.mxu0 %v746
    %1060 = vmatpush1.bf16.msra.mxu0 %v745
    %1061 = vmatprep.subr.bf16.mxu0 %v750
    %1062 = vmatpush1.bf16.msra.mxu0 %v749
    %1063 = vmatprep.subr.bf16.mxu0 %v754
    %1064 = vmatpush1.bf16.msra.mxu0 %v753
    %1065 = vmatprep.subr.bf16.mxu0 %v758
    %1066 = vmatpush1.bf16.msra.mxu0 %v757
    %1067 = vmatprep.subr.bf16.mxu0 %v762
    %1068 = vmatpush1.bf16.msra.mxu0 %v761
    %1069 = vmatprep.mubr.bf16.mxu0 %v289
    %1070 = vmatmul.mubr.bf16.gmra.mrb[0].mxu0 %v288
    %v1071 = vpop.f32.mrb[0].mxu0
    %v1072 = vadd.f32 %v306, %v1071
    %v1073 = vpop.f32.mrb[0].mxu0
    %v1074 = vadd.f32 %v310, %v1073
    %v1075 = vpop.f32.mrb[0].mxu0
    %v1076 = vpop.f32.mrb[0].mxu0
    %1077 = vdwg.mxu0
    %1078 = vmatprep.subr.bf16.mxu0 %v766
    %1079 = vmatpush1.bf16.msra.mxu0 %v765
    %1080 = vmatprep.subr.bf16.mxu0 %v770
    %1081 = vmatpush1.bf16.msra.mxu0 %v769
    %1082 = vmatprep.subr.bf16.mxu0 %v774
    %1083 = vmatpush1.bf16.msra.mxu0 %v773
    %1084 = vmatprep.subr.bf16.mxu0 %v778
    %1085 = vmatpush1.bf16.msra.mxu0 %v777
    %1086 = vmatprep.subr.bf16.mxu0 %v782
    %1087 = vmatpush1.bf16.msra.mxu0 %v781
    %1088 = vmatprep.subr.bf16.mxu0 %v786
    %1089 = vmatpush1.bf16.msra.mxu0 %v785
    %1090 = vmatprep.subr.bf16.mxu0 %v790
    %1091 = vmatpush1.bf16.msra.mxu0 %v789
    %1092 = vmatprep.subr.bf16.mxu0 %v794
    %1093 = vmatpush1.bf16.msra.mxu0 %v793
    %1094 = vmatprep.subr.bf16.mxu0 %v798
    %1095 = vmatpush1.bf16.msra.mxu0 %v797
    %1096 = vmatprep.subr.bf16.mxu0 %v802
    %1097 = vmatpush1.bf16.msra.mxu0 %v801
    %1098 = vmatprep.subr.bf16.mxu0 %v806
    %1099 = vmatpush1.bf16.msra.mxu0 %v805
    %1100 = vmatprep.subr.bf16.mxu0 %v810
    %1101 = vmatpush1.bf16.msra.mxu0 %v809
    %1102 = vmatprep.subr.bf16.mxu0 %v814
    %1103 = vmatpush1.bf16.msra.mxu0 %v813
    %1104 = vmatprep.subr.bf16.mxu0 %v818
    %1105 = vmatpush1.bf16.msra.mxu0 %v817
    %1106 = vmatprep.subr.bf16.mxu0 %v822
    %1107 = vmatpush1.bf16.msra.mxu0 %v821
    %1108 = vmatprep.subr.bf16.mxu0 %v826
    %1109 = vmatpush1.bf16.msra.mxu0 %v825
    %1110 = vmatprep.mubr.bf16.mxu0 %v291
    %1111 = vmatmul.mubr.bf16.gmra.mrb[0].mxu0 %v290
    %v1112 = vpop.f32.mrb[0].mxu0
    %v1113 = vadd.f32 %v1072, %v1112
    %v1114 = vpop.f32.mrb[0].mxu0
    %v1115 = vadd.f32 %v1074, %v1114
    %v1116 = vpop.f32.mrb[0].mxu0
    %v1117 = vpop.f32.mrb[0].mxu0
    %1118 = vdwg.mxu0
    %vm1119 = vcmp.gt.f32.partialorder %v1031, 0.0
    %vm1120 = vcmp.gt.f32.partialorder %v1033, 0.0
    %vm1121 = vcmp.gt.f32.partialorder %v1113, 0.0
    %vm1122 = vcmp.gt.f32.partialorder %v1115, 0.0
    %v1123 = vmul.f32 %v1031, 0.2
    %v1124 = vmul.f32 %v1033, 0.2
    %v1125 = vmul.f32 %v1113, 0.2
    %v1126 = vmul.f32 %v1115, 0.2
    %v1127 = vsel %vm1119, %v1031, %v1123
    %v1128 = vsel %vm1120, %v1033, %v1124
    %v1129 = vsel %vm1121, %v1113, %v1125
    %v1130 = vsel %vm1122, %v1115, %v1126
    %v1131 = vld [vmem:[#allocation7 + $0x10] sm:$0xff]
    %v1132 = vld [vmem:[#allocation7 + $0x18] sm:$0xff]
    %v1133 = vld [vmem:[#allocation7 + $0x40] sm:$0xff]
    %v1134 = vld [vmem:[#allocation7 + $0x48] sm:$0xff]
    %v1135 = vld [vmem:[#allocation7 + $0x70] sm:$0xff]
    %v1136 = vld [vmem:[#allocation7 + $0x78] sm:$0xff]
    %v1137 = vld [vmem:[#allocation7 + $0xa0] sm:$0xff]
    %v1138 = vld [vmem:[#allocation7 + $0xa8] sm:$0xff]
    %v1139 = vld [vmem:[#allocation7 + $0xd0] sm:$0xff]
    %v1140 = vld [vmem:[#allocation7 + $0xd8] sm:$0xff]
    %v1141 = vld [vmem:[#allocation7 + $0x100] sm:$0xff]
    %v1142 = vld [vmem:[#allocation7 + $0x108] sm:$0xff]
    %v1143 = vld [vmem:[#allocation7 + $0x130] sm:$0xff]
    %v1144 = vld [vmem:[#allocation7 + $0x138] sm:$0xff]
    %v1145 = vld [vmem:[#allocation7 + $0x160] sm:$0xff]
    %v1146 = vld [vmem:[#allocation7 + $0x168] sm:$0xff]
    %v1147 = vld [vmem:[#allocation7 + $0x190] sm:$0xff]
    %v1148 = vld [vmem:[#allocation7 + $0x198] sm:$0xff]
    %v1149 = vld [vmem:[#allocation7 + $0x1c0] sm:$0xff]
    %v1150 = vld [vmem:[#allocation7 + $0x1c8] sm:$0xff]
    %v1151 = vld [vmem:[#allocation7 + $0x1f0] sm:$0xff]
    %v1152 = vld [vmem:[#allocation7 + $0x1f8] sm:$0xff]
    %v1153 = vld [vmem:[#allocation7 + $0x220] sm:$0xff]
    %v1154 = vld [vmem:[#allocation7 + $0x228] sm:$0xff]
    %v1155 = vld [vmem:[#allocation7 + $0x250] sm:$0xff]
    %v1156 = vld [vmem:[#allocation7 + $0x258] sm:$0xff]
    %v1157 = vld [vmem:[#allocation7 + $0x280] sm:$0xff]
    %v1158 = vld [vmem:[#allocation7 + $0x288] sm:$0xff]
    %v1159 = vld [vmem:[#allocation7 + $0x2b0] sm:$0xff]
    %v1160 = vld [vmem:[#allocation7 + $0x2b8] sm:$0xff]
    %v1161 = vld [vmem:[#allocation7 + $0x2e0] sm:$0xff]
    %v1162 = vld [vmem:[#allocation7 + $0x2e8] sm:$0xff]
    %v1163 = vld [vmem:[#allocation7 + $0x310] sm:$0xff]
    %v1164 = vld [vmem:[#allocation7 + $0x318] sm:$0xff]
    %v1165 = vld [vmem:[#allocation7 + $0x340] sm:$0xff]
    %v1166 = vld [vmem:[#allocation7 + $0x348] sm:$0xff]
    %v1167 = vld [vmem:[#allocation7 + $0x370] sm:$0xff]
    %v1168 = vld [vmem:[#allocation7 + $0x378] sm:$0xff]
    %v1169 = vld [vmem:[#allocation7 + $0x3a0] sm:$0xff]
    %v1170 = vld [vmem:[#allocation7 + $0x3a8] sm:$0xff]
    %v1171 = vld [vmem:[#allocation7 + $0x3d0] sm:$0xff]
    %v1172 = vld [vmem:[#allocation7 + $0x3d8] sm:$0xff]
    %v1173 = vld [vmem:[#allocation7 + $0x400] sm:$0xff]
    %v1174 = vld [vmem:[#allocation7 + $0x408] sm:$0xff]
    %v1175 = vld [vmem:[#allocation7 + $0x430] sm:$0xff]
    %v1176 = vld [vmem:[#allocation7 + $0x438] sm:$0xff]
    %v1177 = vld [vmem:[#allocation7 + $0x460] sm:$0xff]
    %v1178 = vld [vmem:[#allocation7 + $0x468] sm:$0xff]
    %v1179 = vld [vmem:[#allocation7 + $0x490] sm:$0xff]
    %v1180 = vld [vmem:[#allocation7 + $0x498] sm:$0xff]
    %v1181 = vld [vmem:[#allocation7 + $0x4c0] sm:$0xff]
    %v1182 = vld [vmem:[#allocation7 + $0x4c8] sm:$0xff]
    %v1183 = vld [vmem:[#allocation7 + $0x4f0] sm:$0xff]
    %v1184 = vld [vmem:[#allocation7 + $0x4f8] sm:$0xff]
    %v1185 = vld [vmem:[#allocation7 + $0x520] sm:$0xff]
    %v1186 = vld [vmem:[#allocation7 + $0x528] sm:$0xff]
    %v1187 = vld [vmem:[#allocation7 + $0x550] sm:$0xff]
    %v1188 = vld [vmem:[#allocation7 + $0x558] sm:$0xff]
    %v1189 = vld [vmem:[#allocation7 + $0x580] sm:$0xff]
    %v1190 = vld [vmem:[#allocation7 + $0x588] sm:$0xff]
    %v1191 = vld [vmem:[#allocation7 + $0x5b0] sm:$0xff]
    %v1192 = vld [vmem:[#allocation7 + $0x5b8] sm:$0xff]
    %v1193 = vld [vmem:[#allocation7 + $0x5e0] sm:$0xff]
    %v1194 = vld [vmem:[#allocation7 + $0x5e8] sm:$0xff]
    %v1195 = vld [vmem:[#allocation7 + $0x610] sm:$0xff]
    %v1196 = vld [vmem:[#allocation7 + $0x618] sm:$0xff]
    %v1197 = vld [vmem:[#allocation7 + $0x640] sm:$0xff]
    %v1198 = vld [vmem:[#allocation7 + $0x648] sm:$0xff]
    %v1199 = vld [vmem:[#allocation7 + $0x670] sm:$0xff]
    %v1200 = vld [vmem:[#allocation7 + $0x678] sm:$0xff]
    %v1201 = vld [vmem:[#allocation7 + $0x6a0] sm:$0xff]
    %v1202 = vld [vmem:[#allocation7 + $0x6a8] sm:$0xff]
    %v1203 = vld [vmem:[#allocation7 + $0x6d0] sm:$0xff]
    %v1204 = vld [vmem:[#allocation7 + $0x6d8] sm:$0xff]
    %v1205 = vld [vmem:[#allocation7 + $0x700] sm:$0xff]
    %v1206 = vld [vmem:[#allocation7 + $0x708] sm:$0xff]
    %v1207 = vld [vmem:[#allocation7 + $0x730] sm:$0xff]
    %v1208 = vld [vmem:[#allocation7 + $0x738] sm:$0xff]
    %v1209 = vld [vmem:[#allocation7 + $0x760] sm:$0xff]
    %v1210 = vld [vmem:[#allocation7 + $0x768] sm:$0xff]
    %v1211 = vld [vmem:[#allocation7 + $0x790] sm:$0xff]
    %v1212 = vld [vmem:[#allocation7 + $0x798] sm:$0xff]
    %v1213 = vld [vmem:[#allocation7 + $0x7c0] sm:$0xff]
    %v1214 = vld [vmem:[#allocation7 + $0x7c8] sm:$0xff]
    %v1215 = vld [vmem:[#allocation7 + $0x7f0] sm:$0xff]
    %v1216 = vld [vmem:[#allocation7 + $0x7f8] sm:$0xff]
    %v1217 = vld [vmem:[#allocation7 + $0x820] sm:$0xff]
    %v1218 = vld [vmem:[#allocation7 + $0x828] sm:$0xff]
    %v1219 = vld [vmem:[#allocation7 + $0x850] sm:$0xff]
    %v1220 = vld [vmem:[#allocation7 + $0x858] sm:$0xff]
    %v1221 = vld [vmem:[#allocation7 + $0x880] sm:$0xff]
    %v1222 = vld [vmem:[#allocation7 + $0x888] sm:$0xff]
    %v1223 = vld [vmem:[#allocation7 + $0x8b0] sm:$0xff]
    %v1224 = vld [vmem:[#allocation7 + $0x8b8] sm:$0xff]
    %v1225 = vld [vmem:[#allocation7 + $0x8e0] sm:$0xff]
    %v1226 = vld [vmem:[#allocation7 + $0x8e8] sm:$0xff]
    %v1227 = vld [vmem:[#allocation7 + $0x910] sm:$0xff]
    %v1228 = vld [vmem:[#allocation7 + $0x918] sm:$0xff]
    %v1229 = vld [vmem:[#allocation7 + $0x940] sm:$0xff]
    %v1230 = vld [vmem:[#allocation7 + $0x948] sm:$0xff]
    %v1231 = vld [vmem:[#allocation7 + $0x970] sm:$0xff]
    %v1232 = vld [vmem:[#allocation7 + $0x978] sm:$0xff]
    %v1233 = vld [vmem:[#allocation7 + $0x9a0] sm:$0xff]
    %v1234 = vld [vmem:[#allocation7 + $0x9a8] sm:$0xff]
    %v1235 = vld [vmem:[#allocation7 + $0x9d0] sm:$0xff]
    %v1236 = vld [vmem:[#allocation7 + $0x9d8] sm:$0xff]
    %v1237 = vld [vmem:[#allocation7 + $0xa00] sm:$0xff]
    %v1238 = vld [vmem:[#allocation7 + $0xa08] sm:$0xff]
    %v1239 = vld [vmem:[#allocation7 + $0xa30] sm:$0xff]
    %v1240 = vld [vmem:[#allocation7 + $0xa38] sm:$0xff]
    %v1241 = vld [vmem:[#allocation7 + $0xa60] sm:$0xff]
    %v1242 = vld [vmem:[#allocation7 + $0xa68] sm:$0xff]
    %v1243 = vld [vmem:[#allocation7 + $0xa90] sm:$0xff]
    %v1244 = vld [vmem:[#allocation7 + $0xa98] sm:$0xff]
    %v1245 = vld [vmem:[#allocation7 + $0xac0] sm:$0xff]
    %v1246 = vld [vmem:[#allocation7 + $0xac8] sm:$0xff]
    %v1247 = vld [vmem:[#allocation7 + $0xaf0] sm:$0xff]
    %v1248 = vld [vmem:[#allocation7 + $0xaf8] sm:$0xff]
    %v1249 = vld [vmem:[#allocation7 + $0xb20] sm:$0xff]
    %v1250 = vld [vmem:[#allocation7 + $0xb28] sm:$0xff]
    %v1251 = vld [vmem:[#allocation7 + $0xb50] sm:$0xff]
    %v1252 = vld [vmem:[#allocation7 + $0xb58] sm:$0xff]
    %v1253 = vld [vmem:[#allocation7 + $0xb80] sm:$0xff]
    %v1254 = vld [vmem:[#allocation7 + $0xb88] sm:$0xff]
    %v1255 = vld [vmem:[#allocation7 + $0xbb0] sm:$0xff]
    %v1256 = vld [vmem:[#allocation7 + $0xbb8] sm:$0xff]
    %v1257 = vld [vmem:[#allocation7 + $0xbe0] sm:$0xff]
    %v1258 = vld [vmem:[#allocation7 + $0xbe8] sm:$0xff]
    %v1259 = vpack.c.bf16 %v1127, %v1127
    %v1260 = vpack.c.bf16 %v1128, %v1128
    %v1261 = vpack.c.bf16 %v1129, %v1129
    %v1262 = vpack.c.bf16 %v1130, %v1130
    %s1263 = scalar_lea.vmem [#allocation5], 2
    %v1264 = vld [vmem:[%s1263] ss:$4 sm:$0xf]
    %v1266 = vlaneseq
    %v1267 = vshrl.u32 %v1266, 7
    %v1268 = vsub.s32 0, %v1267
    %v1269 = vrot.slane %v1264, %v1268
    %v1270 = vlaneseq
    %v1271 = vshrl.u32 %v1270, 7
    %v1272 = vsub.s32 1, %v1271
    %v1273 = vrot.slane %v1264, %v1272
    %v1274 = vlaneseq
    %v1275 = vshrl.u32 %v1274, 7
    %v1276 = vsub.s32 2, %v1275
    %v1277 = vrot.slane %v1264, %v1276
    %v1278 = vlaneseq
    %v1279 = vshrl.u32 %v1278, 7
    %v1280 = vsub.s32 3, %v1279
    %v1281 = vrot.slane %v1264, %v1280
    %v1414 = vunpack.c.l.b16 %v1131
    %v1415 = vunpack.c.h.b16 %v1131
    %v1416 = vunpack.c.l.b16 %v1132
    %v1417 = vunpack.c.h.b16 %v1132
    %v1418 = vunpack.c.l.b16 %v1133
    %v1419 = vunpack.c.h.b16 %v1133
    %v1420 = vunpack.c.l.b16 %v1134
    %v1421 = vunpack.c.h.b16 %v1134
    %v1422 = vunpack.c.l.b16 %v1135
    %v1423 = vunpack.c.h.b16 %v1135
    %v1424 = vunpack.c.l.b16 %v1136
    %v1425 = vunpack.c.h.b16 %v1136
    %v1426 = vunpack.c.l.b16 %v1137
    %v1427 = vunpack.c.h.b16 %v1137
    %v1428 = vunpack.c.l.b16 %v1138
    %v1429 = vunpack.c.h.b16 %v1138
    %v1430 = vunpack.c.l.b16 %v1139
    %v1431 = vunpack.c.h.b16 %v1139
    %v1432 = vunpack.c.l.b16 %v1140
    %v1433 = vunpack.c.h.b16 %v1140
    %v1434 = vunpack.c.l.b16 %v1141
    %v1435 = vunpack.c.h.b16 %v1141
    %v1436 = vunpack.c.l.b16 %v1142
    %v1437 = vunpack.c.h.b16 %v1142
    %v1438 = vunpack.c.l.b16 %v1143
    %v1439 = vunpack.c.h.b16 %v1143
    %v1440 = vunpack.c.l.b16 %v1144
    %v1441 = vunpack.c.h.b16 %v1144
    %v1442 = vunpack.c.l.b16 %v1145
    %v1443 = vunpack.c.h.b16 %v1145
    %v1444 = vunpack.c.l.b16 %v1146
    %v1445 = vunpack.c.h.b16 %v1146
    %v1446 = vunpack.c.l.b16 %v1147
    %v1447 = vunpack.c.h.b16 %v1147
    %v1448 = vunpack.c.l.b16 %v1148
    %v1449 = vunpack.c.h.b16 %v1148
    %v1450 = vunpack.c.l.b16 %v1149
    %v1451 = vunpack.c.h.b16 %v1149
    %v1452 = vunpack.c.l.b16 %v1150
    %v1453 = vunpack.c.h.b16 %v1150
    %v1454 = vunpack.c.l.b16 %v1151
    %v1455 = vunpack.c.h.b16 %v1151
    %v1456 = vunpack.c.l.b16 %v1152
    %v1457 = vunpack.c.h.b16 %v1152
    %v1458 = vunpack.c.l.b16 %v1153
    %v1459 = vunpack.c.h.b16 %v1153
    %v1460 = vunpack.c.l.b16 %v1154
    %v1461 = vunpack.c.h.b16 %v1154
    %v1462 = vunpack.c.l.b16 %v1155
    %v1463 = vunpack.c.h.b16 %v1155
    %v1464 = vunpack.c.l.b16 %v1156
    %v1465 = vunpack.c.h.b16 %v1156
    %v1466 = vunpack.c.l.b16 %v1157
    %v1467 = vunpack.c.h.b16 %v1157
    %v1468 = vunpack.c.l.b16 %v1158
    %v1469 = vunpack.c.h.b16 %v1158
    %v1470 = vunpack.c.l.b16 %v1159
    %v1471 = vunpack.c.h.b16 %v1159
    %v1472 = vunpack.c.l.b16 %v1160
    %v1473 = vunpack.c.h.b16 %v1160
    %v1474 = vunpack.c.l.b16 %v1161
    %v1475 = vunpack.c.h.b16 %v1161
    %v1476 = vunpack.c.l.b16 %v1162
    %v1477 = vunpack.c.h.b16 %v1162
    %v1478 = vunpack.c.l.b16 %v1163
    %v1479 = vunpack.c.h.b16 %v1163
    %v1480 = vunpack.c.l.b16 %v1164
    %v1481 = vunpack.c.h.b16 %v1164
    %v1482 = vunpack.c.l.b16 %v1165
    %v1483 = vunpack.c.h.b16 %v1165
    %v1484 = vunpack.c.l.b16 %v1166
    %v1485 = vunpack.c.h.b16 %v1166
    %v1486 = vunpack.c.l.b16 %v1167
    %v1487 = vunpack.c.h.b16 %v1167
    %v1488 = vunpack.c.l.b16 %v1168
    %v1489 = vunpack.c.h.b16 %v1168
    %v1490 = vunpack.c.l.b16 %v1169
    %v1491 = vunpack.c.h.b16 %v1169
    %v1492 = vunpack.c.l.b16 %v1170
    %v1493 = vunpack.c.h.b16 %v1170
    %v1494 = vunpack.c.l.b16 %v1171
    %v1495 = vunpack.c.h.b16 %v1171
    %v1496 = vunpack.c.l.b16 %v1172
    %v1497 = vunpack.c.h.b16 %v1172
    %v1498 = vunpack.c.l.b16 %v1173
    %v1499 = vunpack.c.h.b16 %v1173
    %v1500 = vunpack.c.l.b16 %v1174
    %v1501 = vunpack.c.h.b16 %v1174
    %v1502 = vunpack.c.l.b16 %v1175
    %v1503 = vunpack.c.h.b16 %v1175
    %v1504 = vunpack.c.l.b16 %v1176
    %v1505 = vunpack.c.h.b16 %v1176
    %v1506 = vunpack.c.l.b16 %v1177
    %v1507 = vunpack.c.h.b16 %v1177
    %v1508 = vunpack.c.l.b16 %v1178
    %v1509 = vunpack.c.h.b16 %v1178
    %v1510 = vunpack.c.l.b16 %v1179
    %v1511 = vunpack.c.h.b16 %v1179
    %v1512 = vunpack.c.l.b16 %v1180
    %v1513 = vunpack.c.h.b16 %v1180
    %v1514 = vunpack.c.l.b16 %v1181
    %v1515 = vunpack.c.h.b16 %v1181
    %v1516 = vunpack.c.l.b16 %v1182
    %v1517 = vunpack.c.h.b16 %v1182
    %v1518 = vunpack.c.l.b16 %v1183
    %v1519 = vunpack.c.h.b16 %v1183
    %v1520 = vunpack.c.l.b16 %v1184
    %v1521 = vunpack.c.h.b16 %v1184
    %v1522 = vunpack.c.l.b16 %v1185
    %v1523 = vunpack.c.h.b16 %v1185
    %v1524 = vunpack.c.l.b16 %v1186
    %v1525 = vunpack.c.h.b16 %v1186
    %v1526 = vunpack.c.l.b16 %v1187
    %v1527 = vunpack.c.h.b16 %v1187
    %v1528 = vunpack.c.l.b16 %v1188
    %v1529 = vunpack.c.h.b16 %v1188
    %v1530 = vunpack.c.l.b16 %v1189
    %v1531 = vunpack.c.h.b16 %v1189
    %v1532 = vunpack.c.l.b16 %v1190
    %v1533 = vunpack.c.h.b16 %v1190
    %v1534 = vunpack.c.l.b16 %v1191
    %v1535 = vunpack.c.h.b16 %v1191
    %v1536 = vunpack.c.l.b16 %v1192
    %v1537 = vunpack.c.h.b16 %v1192
    %v1538 = vunpack.c.l.b16 %v1193
    %v1539 = vunpack.c.h.b16 %v1193
    %v1540 = vunpack.c.l.b16 %v1194
    %v1541 = vunpack.c.h.b16 %v1194
    %v1542 = vunpack.c.l.b16 %v1195
    %v1543 = vunpack.c.h.b16 %v1195
    %v1544 = vunpack.c.l.b16 %v1196
    %v1545 = vunpack.c.h.b16 %v1196
    %v1546 = vunpack.c.l.b16 %v1197
    %v1547 = vunpack.c.h.b16 %v1197
    %v1548 = vunpack.c.l.b16 %v1198
    %v1549 = vunpack.c.h.b16 %v1198
    %v1550 = vunpack.c.l.b16 %v1199
    %v1551 = vunpack.c.h.b16 %v1199
    %v1552 = vunpack.c.l.b16 %v1200
    %v1553 = vunpack.c.h.b16 %v1200
    %v1554 = vunpack.c.l.b16 %v1201
    %v1555 = vunpack.c.h.b16 %v1201
    %v1556 = vunpack.c.l.b16 %v1202
    %v1557 = vunpack.c.h.b16 %v1202
    %v1558 = vunpack.c.l.b16 %v1203
    %v1559 = vunpack.c.h.b16 %v1203
    %v1560 = vunpack.c.l.b16 %v1204
    %v1561 = vunpack.c.h.b16 %v1204
    %v1562 = vunpack.c.l.b16 %v1205
    %v1563 = vunpack.c.h.b16 %v1205
    %v1564 = vunpack.c.l.b16 %v1206
    %v1565 = vunpack.c.h.b16 %v1206
    %v1566 = vunpack.c.l.b16 %v1207
    %v1567 = vunpack.c.h.b16 %v1207
    %v1568 = vunpack.c.l.b16 %v1208
    %v1569 = vunpack.c.h.b16 %v1208
    %v1570 = vunpack.c.l.b16 %v1209
    %v1571 = vunpack.c.h.b16 %v1209
    %v1572 = vunpack.c.l.b16 %v1210
    %v1573 = vunpack.c.h.b16 %v1210
    %v1574 = vunpack.c.l.b16 %v1211
    %v1575 = vunpack.c.h.b16 %v1211
    %v1576 = vunpack.c.l.b16 %v1212
    %v1577 = vunpack.c.h.b16 %v1212
    %v1578 = vunpack.c.l.b16 %v1213
    %v1579 = vunpack.c.h.b16 %v1213
    %v1580 = vunpack.c.l.b16 %v1214
    %v1581 = vunpack.c.h.b16 %v1214
    %v1582 = vunpack.c.l.b16 %v1215
    %v1583 = vunpack.c.h.b16 %v1215
    %v1584 = vunpack.c.l.b16 %v1216
    %v1585 = vunpack.c.h.b16 %v1216
    %v1586 = vunpack.c.l.b16 %v1217
    %v1587 = vunpack.c.h.b16 %v1217
    %v1588 = vunpack.c.l.b16 %v1218
    %v1589 = vunpack.c.h.b16 %v1218
    %v1590 = vunpack.c.l.b16 %v1219
    %v1591 = vunpack.c.h.b16 %v1219
    %v1592 = vunpack.c.l.b16 %v1220
    %v1593 = vunpack.c.h.b16 %v1220
    %v1594 = vunpack.c.l.b16 %v1221
    %v1595 = vunpack.c.h.b16 %v1221
    %v1596 = vunpack.c.l.b16 %v1222
    %v1597 = vunpack.c.h.b16 %v1222
    %v1598 = vunpack.c.l.b16 %v1223
    %v1599 = vunpack.c.h.b16 %v1223
    %v1600 = vunpack.c.l.b16 %v1224
    %v1601 = vunpack.c.h.b16 %v1224
    %v1602 = vunpack.c.l.b16 %v1225
    %v1603 = vunpack.c.h.b16 %v1225
    %v1604 = vunpack.c.l.b16 %v1226
    %v1605 = vunpack.c.h.b16 %v1226
    %v1606 = vunpack.c.l.b16 %v1227
    %v1607 = vunpack.c.h.b16 %v1227
    %v1608 = vunpack.c.l.b16 %v1228
    %v1609 = vunpack.c.h.b16 %v1228
    %v1610 = vunpack.c.l.b16 %v1229
    %v1611 = vunpack.c.h.b16 %v1229
    %v1612 = vunpack.c.l.b16 %v1230
    %v1613 = vunpack.c.h.b16 %v1230
    %v1614 = vunpack.c.l.b16 %v1231
    %v1615 = vunpack.c.h.b16 %v1231
    %v1616 = vunpack.c.l.b16 %v1232
    %v1617 = vunpack.c.h.b16 %v1232
    %v1618 = vunpack.c.l.b16 %v1233
    %v1619 = vunpack.c.h.b16 %v1233
    %v1620 = vunpack.c.l.b16 %v1234
    %v1621 = vunpack.c.h.b16 %v1234
    %v1622 = vunpack.c.l.b16 %v1235
    %v1623 = vunpack.c.h.b16 %v1235
    %v1624 = vunpack.c.l.b16 %v1236
    %v1625 = vunpack.c.h.b16 %v1236
    %v1626 = vunpack.c.l.b16 %v1237
    %v1627 = vunpack.c.h.b16 %v1237
    %v1628 = vunpack.c.l.b16 %v1238
    %v1629 = vunpack.c.h.b16 %v1238
    %v1630 = vunpack.c.l.b16 %v1239
    %v1631 = vunpack.c.h.b16 %v1239
    %v1632 = vunpack.c.l.b16 %v1240
    %v1633 = vunpack.c.h.b16 %v1240
    %v1634 = vunpack.c.l.b16 %v1241
    %v1635 = vunpack.c.h.b16 %v1241
    %v1636 = vunpack.c.l.b16 %v1242
    %v1637 = vunpack.c.h.b16 %v1242
    %v1638 = vunpack.c.l.b16 %v1243
    %v1639 = vunpack.c.h.b16 %v1243
    %v1640 = vunpack.c.l.b16 %v1244
    %v1641 = vunpack.c.h.b16 %v1244
    %v1642 = vunpack.c.l.b16 %v1245
    %v1643 = vunpack.c.h.b16 %v1245
    %v1644 = vunpack.c.l.b16 %v1246
    %v1645 = vunpack.c.h.b16 %v1246
    %v1646 = vunpack.c.l.b16 %v1247
    %v1647 = vunpack.c.h.b16 %v1247
    %v1648 = vunpack.c.l.b16 %v1248
    %v1649 = vunpack.c.h.b16 %v1248
    %v1650 = vunpack.c.l.b16 %v1249
    %v1651 = vunpack.c.h.b16 %v1249
    %v1652 = vunpack.c.l.b16 %v1250
    %v1653 = vunpack.c.h.b16 %v1250
    %v1654 = vunpack.c.l.b16 %v1251
    %v1655 = vunpack.c.h.b16 %v1251
    %v1656 = vunpack.c.l.b16 %v1252
    %v1657 = vunpack.c.h.b16 %v1252
    %v1658 = vunpack.c.l.b16 %v1253
    %v1659 = vunpack.c.h.b16 %v1253
    %v1660 = vunpack.c.l.b16 %v1254
    %v1661 = vunpack.c.h.b16 %v1254
    %v1662 = vunpack.c.l.b16 %v1255
    %v1663 = vunpack.c.h.b16 %v1255
    %v1664 = vunpack.c.l.b16 %v1256
    %v1665 = vunpack.c.h.b16 %v1256
    %v1666 = vunpack.c.l.b16 %v1257
    %v1667 = vunpack.c.h.b16 %v1257
    %v1668 = vunpack.c.l.b16 %v1258
    %v1669 = vunpack.c.h.b16 %v1258
    %v1670 = vpack.c.b16 %v1418, %v1414
    %v1671 = vpack.c.b16 %v1419, %v1415
    %v1672 = vpack.c.b16 %v1420, %v1416
    %v1673 = vpack.c.b16 %v1421, %v1417
    %v1674 = vpack.c.b16 %v1426, %v1422
    %v1675 = vpack.c.b16 %v1427, %v1423
    %v1676 = vpack.c.b16 %v1428, %v1424
    %v1677 = vpack.c.b16 %v1429, %v1425
    %v1678 = vpack.c.b16 %v1434, %v1430
    %v1679 = vpack.c.b16 %v1435, %v1431
    %v1680 = vpack.c.b16 %v1436, %v1432
    %v1681 = vpack.c.b16 %v1437, %v1433
    %v1682 = vpack.c.b16 %v1442, %v1438
    %v1683 = vpack.c.b16 %v1443, %v1439
    %v1684 = vpack.c.b16 %v1444, %v1440
    %v1685 = vpack.c.b16 %v1445, %v1441
    %v1686 = vpack.c.b16 %v1450, %v1446
    %v1687 = vpack.c.b16 %v1451, %v1447
    %v1688 = vpack.c.b16 %v1452, %v1448
    %v1689 = vpack.c.b16 %v1453, %v1449
    %v1690 = vpack.c.b16 %v1458, %v1454
    %v1691 = vpack.c.b16 %v1459, %v1455
    %v1692 = vpack.c.b16 %v1460, %v1456
    %v1693 = vpack.c.b16 %v1461, %v1457
    %v1694 = vpack.c.b16 %v1466, %v1462
    %v1695 = vpack.c.b16 %v1467, %v1463
    %v1696 = vpack.c.b16 %v1468, %v1464
    %v1697 = vpack.c.b16 %v1469, %v1465
    %v1698 = vpack.c.b16 %v1474, %v1470
    %v1699 = vpack.c.b16 %v1475, %v1471
    %v1700 = vpack.c.b16 %v1476, %v1472
    %v1701 = vpack.c.b16 %v1477, %v1473
    %v1702 = vpack.c.b16 %v1482, %v1478
    %v1703 = vpack.c.b16 %v1483, %v1479
    %v1704 = vpack.c.b16 %v1484, %v1480
    %v1705 = vpack.c.b16 %v1485, %v1481
    %v1706 = vpack.c.b16 %v1490, %v1486
    %v1707 = vpack.c.b16 %v1491, %v1487
    %v1708 = vpack.c.b16 %v1492, %v1488
    %v1709 = vpack.c.b16 %v1493, %v1489
    %v1710 = vpack.c.b16 %v1498, %v1494
    %v1711 = vpack.c.b16 %v1499, %v1495
    %v1712 = vpack.c.b16 %v1500, %v1496
    %v1713 = vpack.c.b16 %v1501, %v1497
    %v1714 = vpack.c.b16 %v1506, %v1502
    %v1715 = vpack.c.b16 %v1507, %v1503
    %v1716 = vpack.c.b16 %v1508, %v1504
    %v1717 = vpack.c.b16 %v1509, %v1505
    %v1718 = vpack.c.b16 %v1514, %v1510
    %v1719 = vpack.c.b16 %v1515, %v1511
    %v1720 = vpack.c.b16 %v1516, %v1512
    %v1721 = vpack.c.b16 %v1517, %v1513
    %v1722 = vpack.c.b16 %v1522, %v1518
    %v1723 = vpack.c.b16 %v1523, %v1519
    %v1724 = vpack.c.b16 %v1524, %v1520
    %v1725 = vpack.c.b16 %v1525, %v1521
    %v1726 = vpack.c.b16 %v1530, %v1526
    %v1727 = vpack.c.b16 %v1531, %v1527
    %v1728 = vpack.c.b16 %v1532, %v1528
    %v1729 = vpack.c.b16 %v1533, %v1529
    %v1730 = vpack.c.b16 %v1538, %v1534
    %v1731 = vpack.c.b16 %v1539, %v1535
    %v1732 = vpack.c.b16 %v1540, %v1536
    %v1733 = vpack.c.b16 %v1541, %v1537
    %v1734 = vpack.c.b16 %v1546, %v1542
    %v1735 = vpack.c.b16 %v1547, %v1543
    %v1736 = vpack.c.b16 %v1548, %v1544
    %v1737 = vpack.c.b16 %v1549, %v1545
    %v1738 = vpack.c.b16 %v1554, %v1550
    %v1739 = vpack.c.b16 %v1555, %v1551
    %v1740 = vpack.c.b16 %v1556, %v1552
    %v1741 = vpack.c.b16 %v1557, %v1553
    %v1742 = vpack.c.b16 %v1562, %v1558
    %v1743 = vpack.c.b16 %v1563, %v1559
    %v1744 = vpack.c.b16 %v1564, %v1560
    %v1745 = vpack.c.b16 %v1565, %v1561
    %v1746 = vpack.c.b16 %v1570, %v1566
    %v1747 = vpack.c.b16 %v1571, %v1567
    %v1748 = vpack.c.b16 %v1572, %v1568
    %v1749 = vpack.c.b16 %v1573, %v1569
    %v1750 = vpack.c.b16 %v1578, %v1574
    %v1751 = vpack.c.b16 %v1579, %v1575
    %v1752 = vpack.c.b16 %v1580, %v1576
    %v1753 = vpack.c.b16 %v1581, %v1577
    %v1754 = vpack.c.b16 %v1586, %v1582
    %v1755 = vpack.c.b16 %v1587, %v1583
    %v1756 = vpack.c.b16 %v1588, %v1584
    %v1757 = vpack.c.b16 %v1589, %v1585
    %v1758 = vpack.c.b16 %v1594, %v1590
    %v1759 = vpack.c.b16 %v1595, %v1591
    %v1760 = vpack.c.b16 %v1596, %v1592
    %v1761 = vpack.c.b16 %v1597, %v1593
    %v1762 = vpack.c.b16 %v1602, %v1598
    %v1763 = vpack.c.b16 %v1603, %v1599
    %v1764 = vpack.c.b16 %v1604, %v1600
    %v1765 = vpack.c.b16 %v1605, %v1601
    %v1766 = vpack.c.b16 %v1610, %v1606
    %v1767 = vpack.c.b16 %v1611, %v1607
    %v1768 = vpack.c.b16 %v1612, %v1608
    %v1769 = vpack.c.b16 %v1613, %v1609
    %v1770 = vpack.c.b16 %v1618, %v1614
    %v1771 = vpack.c.b16 %v1619, %v1615
    %v1772 = vpack.c.b16 %v1620, %v1616
    %v1773 = vpack.c.b16 %v1621, %v1617
    %v1774 = vpack.c.b16 %v1626, %v1622
    %v1775 = vpack.c.b16 %v1627, %v1623
    %v1776 = vpack.c.b16 %v1628, %v1624
    %v1777 = vpack.c.b16 %v1629, %v1625
    %v1778 = vpack.c.b16 %v1634, %v1630
    %v1779 = vpack.c.b16 %v1635, %v1631
    %v1780 = vpack.c.b16 %v1636, %v1632
    %v1781 = vpack.c.b16 %v1637, %v1633
    %v1782 = vpack.c.b16 %v1642, %v1638
    %v1783 = vpack.c.b16 %v1643, %v1639
    %v1784 = vpack.c.b16 %v1644, %v1640
    %v1785 = vpack.c.b16 %v1645, %v1641
    %v1786 = vpack.c.b16 %v1650, %v1646
    %v1787 = vpack.c.b16 %v1651, %v1647
    %v1788 = vpack.c.b16 %v1652, %v1648
    %v1789 = vpack.c.b16 %v1653, %v1649
    %v1790 = vpack.c.b16 %v1658, %v1654
    %v1791 = vpack.c.b16 %v1659, %v1655
    %v1792 = vpack.c.b16 %v1660, %v1656
    %v1793 = vpack.c.b16 %v1661, %v1657
    %v1794 = vpack.c.b16 %v1666, %v1662
    %v1795 = vpack.c.b16 %v1667, %v1663
    %v1796 = vpack.c.b16 %v1668, %v1664
    %v1797 = vpack.c.b16 %v1669, %v1665
    %1926 = vmatprep.subr.bf16.mxu0 %v1671
    %1927 = vmatpush1.bf16.msra.mxu0 %v1670
    %1928 = vmatprep.subr.bf16.mxu0 %v1675
    %1929 = vmatpush1.bf16.msra.mxu0 %v1674
    %1930 = vmatprep.subr.bf16.mxu0 %v1679
    %1931 = vmatpush1.bf16.msra.mxu0 %v1678
    %1932 = vmatprep.subr.bf16.mxu0 %v1683
    %1933 = vmatpush1.bf16.msra.mxu0 %v1682
    %1934 = vmatprep.subr.bf16.mxu0 %v1687
    %1935 = vmatpush1.bf16.msra.mxu0 %v1686
    %1936 = vmatprep.subr.bf16.mxu0 %v1691
    %1937 = vmatpush1.bf16.msra.mxu0 %v1690
    %1938 = vmatprep.subr.bf16.mxu0 %v1695
    %1939 = vmatpush1.bf16.msra.mxu0 %v1694
    %1940 = vmatprep.subr.bf16.mxu0 %v1699
    %1941 = vmatpush1.bf16.msra.mxu0 %v1698
    %1942 = vmatprep.subr.bf16.mxu0 %v1703
    %1943 = vmatpush1.bf16.msra.mxu0 %v1702
    %1944 = vmatprep.subr.bf16.mxu0 %v1707
    %1945 = vmatpush1.bf16.msra.mxu0 %v1706
    %1946 = vmatprep.subr.bf16.mxu0 %v1711
    %1947 = vmatpush1.bf16.msra.mxu0 %v1710
    %1948 = vmatprep.subr.bf16.mxu0 %v1715
    %1949 = vmatpush1.bf16.msra.mxu0 %v1714
    %1950 = vmatprep.subr.bf16.mxu0 %v1719
    %1951 = vmatpush1.bf16.msra.mxu0 %v1718
    %1952 = vmatprep.subr.bf16.mxu0 %v1723
    %1953 = vmatpush1.bf16.msra.mxu0 %v1722
    %1954 = vmatprep.subr.bf16.mxu0 %v1727
    %1955 = vmatpush1.bf16.msra.mxu0 %v1726
    %1956 = vmatprep.subr.bf16.mxu0 %v1731
    %1957 = vmatpush1.bf16.msra.mxu0 %v1730
    %1958 = vmatprep.mubr.bf16.mxu0 %v1260
    %1959 = vmatmul.mubr.bf16.gmra.mrb[0].mxu0 %v1259
    %v1960 = vpop.f32.mrb[0].mxu0
    %v1961 = vadd.f32 %v1269, %v1960
    %v1962 = vpop.f32.mrb[0].mxu0
    %v1963 = vadd.f32 %v1273, %v1962
    %v1964 = vpop.f32.mrb[0].mxu0
    %v1965 = vpop.f32.mrb[0].mxu0
    %1966 = vdwg.mxu0
    %1967 = vmatprep.subr.bf16.mxu0 %v1735
    %1968 = vmatpush1.bf16.msra.mxu0 %v1734
    %1969 = vmatprep.subr.bf16.mxu0 %v1739
    %1970 = vmatpush1.bf16.msra.mxu0 %v1738
    %1971 = vmatprep.subr.bf16.mxu0 %v1743
    %1972 = vmatpush1.bf16.msra.mxu0 %v1742
    %1973 = vmatprep.subr.bf16.mxu0 %v1747
    %1974 = vmatpush1.bf16.msra.mxu0 %v1746
    %1975 = vmatprep.subr.bf16.mxu0 %v1751
    %1976 = vmatpush1.bf16.msra.mxu0 %v1750
    %1977 = vmatprep.subr.bf16.mxu0 %v1755
    %1978 = vmatpush1.bf16.msra.mxu0 %v1754
    %1979 = vmatprep.subr.bf16.mxu0 %v1759
    %1980 = vmatpush1.bf16.msra.mxu0 %v1758
    %1981 = vmatprep.subr.bf16.mxu0 %v1763
    %1982 = vmatpush1.bf16.msra.mxu0 %v1762
    %1983 = vmatprep.subr.bf16.mxu0 %v1767
    %1984 = vmatpush1.bf16.msra.mxu0 %v1766
    %1985 = vmatprep.subr.bf16.mxu0 %v1771
    %1986 = vmatpush1.bf16.msra.mxu0 %v1770
    %1987 = vmatprep.subr.bf16.mxu0 %v1775
    %1988 = vmatpush1.bf16.msra.mxu0 %v1774
    %1989 = vmatprep.subr.bf16.mxu0 %v1779
    %1990 = vmatpush1.bf16.msra.mxu0 %v1778
    %1991 = vmatprep.subr.bf16.mxu0 %v1783
    %1992 = vmatpush1.bf16.msra.mxu0 %v1782
    %1993 = vmatprep.subr.bf16.mxu0 %v1787
    %1994 = vmatpush1.bf16.msra.mxu0 %v1786
    %1995 = vmatprep.subr.bf16.mxu0 %v1791
    %1996 = vmatpush1.bf16.msra.mxu0 %v1790
    %1997 = vmatprep.subr.bf16.mxu0 %v1795
    %1998 = vmatpush1.bf16.msra.mxu0 %v1794
    %1999 = vmatprep.mubr.bf16.mxu0 %v1262
    %2000 = vmatmul.mubr.bf16.gmra.mrb[0].mxu0 %v1261
    %v2001 = vpop.f32.mrb[0].mxu0
    %v2002 = vadd.f32 %v1961, %v2001
    %v2003 = vpop.f32.mrb[0].mxu0
    %v2004 = vadd.f32 %v1963, %v2003
    %v2005 = vpop.f32.mrb[0].mxu0
    %v2006 = vpop.f32.mrb[0].mxu0
    %2007 = vdwg.mxu0
    %2008 = vmatprep.subr.bf16.mxu0 %v1673
    %2009 = vmatpush1.bf16.msra.mxu0 %v1672
    %2010 = vmatprep.subr.bf16.mxu0 %v1677
    %2011 = vmatpush1.bf16.msra.mxu0 %v1676
    %2012 = vmatprep.subr.bf16.mxu0 %v1681
    %2013 = vmatpush1.bf16.msra.mxu0 %v1680
    %2014 = vmatprep.subr.bf16.mxu0 %v1685
    %2015 = vmatpush1.bf16.msra.mxu0 %v1684
    %2016 = vmatprep.subr.bf16.mxu0 %v1689
    %2017 = vmatpush1.bf16.msra.mxu0 %v1688
    %2018 = vmatprep.subr.bf16.mxu0 %v1693
    %2019 = vmatpush1.bf16.msra.mxu0 %v1692
    %2020 = vmatprep.subr.bf16.mxu0 %v1697
    %2021 = vmatpush1.bf16.msra.mxu0 %v1696
    %2022 = vmatprep.subr.bf16.mxu0 %v1701
    %2023 = vmatpush1.bf16.msra.mxu0 %v1700
    %2024 = vmatprep.subr.bf16.mxu0 %v1705
    %2025 = vmatpush1.bf16.msra.mxu0 %v1704
    %2026 = vmatprep.subr.bf16.mxu0 %v1709
    %2027 = vmatpush1.bf16.msra.mxu0 %v1708
    %2028 = vmatprep.subr.bf16.mxu0 %v1713
    %2029 = vmatpush1.bf16.msra.mxu0 %v1712
    %2030 = vmatprep.subr.bf16.mxu0 %v1717
    %2031 = vmatpush1.bf16.msra.mxu0 %v1716
    %2032 = vmatprep.subr.bf16.mxu0 %v1721
    %2033 = vmatpush1.bf16.msra.mxu0 %v1720
    %2034 = vmatprep.subr.bf16.mxu0 %v1725
    %2035 = vmatpush1.bf16.msra.mxu0 %v1724
    %2036 = vmatprep.subr.bf16.mxu0 %v1729
    %2037 = vmatpush1.bf16.msra.mxu0 %v1728
    %2038 = vmatprep.subr.bf16.mxu0 %v1733
    %2039 = vmatpush1.bf16.msra.mxu0 %v1732
    %2040 = vmatprep.mubr.bf16.mxu0 %v1260
    %2041 = vmatmul.mubr.bf16.gmra.mrb[0].mxu0 %v1259
    %v2042 = vpop.f32.mrb[0].mxu0
    %v2043 = vadd.f32 %v1277, %v2042
    %v2044 = vpop.f32.mrb[0].mxu0
    %v2045 = vadd.f32 %v1281, %v2044
    %v2046 = vpop.f32.mrb[0].mxu0
    %v2047 = vpop.f32.mrb[0].mxu0
    %2048 = vdwg.mxu0
    %2049 = vmatprep.subr.bf16.mxu0 %v1737
    %2050 = vmatpush1.bf16.msra.mxu0 %v1736
    %2051 = vmatprep.subr.bf16.mxu0 %v1741
    %2052 = vmatpush1.bf16.msra.mxu0 %v1740
    %2053 = vmatprep.subr.bf16.mxu0 %v1745
    %2054 = vmatpush1.bf16.msra.mxu0 %v1744
    %2055 = vmatprep.subr.bf16.mxu0 %v1749
    %2056 = vmatpush1.bf16.msra.mxu0 %v1748
    %2057 = vmatprep.subr.bf16.mxu0 %v1753
    %2058 = vmatpush1.bf16.msra.mxu0 %v1752
    %2059 = vmatprep.subr.bf16.mxu0 %v1757
    %2060 = vmatpush1.bf16.msra.mxu0 %v1756
    %2061 = vmatprep.subr.bf16.mxu0 %v1761
    %2062 = vmatpush1.bf16.msra.mxu0 %v1760
    %2063 = vmatprep.subr.bf16.mxu0 %v1765
    %2064 = vmatpush1.bf16.msra.mxu0 %v1764
    %2065 = vmatprep.subr.bf16.mxu0 %v1769
    %2066 = vmatpush1.bf16.msra.mxu0 %v1768
    %2067 = vmatprep.subr.bf16.mxu0 %v1773
    %2068 = vmatpush1.bf16.msra.mxu0 %v1772
    %2069 = vmatprep.subr.bf16.mxu0 %v1777
    %2070 = vmatpush1.bf16.msra.mxu0 %v1776
    %2071 = vmatprep.subr.bf16.mxu0 %v1781
    %2072 = vmatpush1.bf16.msra.mxu0 %v1780
    %2073 = vmatprep.subr.bf16.mxu0 %v1785
    %2074 = vmatpush1.bf16.msra.mxu0 %v1784
    %2075 = vmatprep.subr.bf16.mxu0 %v1789
    %2076 = vmatpush1.bf16.msra.mxu0 %v1788
    %2077 = vmatprep.subr.bf16.mxu0 %v1793
    %2078 = vmatpush1.bf16.msra.mxu0 %v1792
    %2079 = vmatprep.subr.bf16.mxu0 %v1797
    %2080 = vmatpush1.bf16.msra.mxu0 %v1796
    %2081 = vmatprep.mubr.bf16.mxu0 %v1262
    %2082 = vmatmul.mubr.bf16.gmra.mrb[0].mxu0 %v1261
    %v2083 = vpop.f32.mrb[0].mxu0
    %v2084 = vadd.f32 %v2043, %v2083
    %v2085 = vpop.f32.mrb[0].mxu0
    %v2086 = vadd.f32 %v2045, %v2085
    %v2087 = vpop.f32.mrb[0].mxu0
    %v2088 = vpop.f32.mrb[0].mxu0
    %2089 = vdwg.mxu0
    %vm2090 = vcmp.gt.f32.partialorder %v2002, 0.0
    %vm2091 = vcmp.gt.f32.partialorder %v2004, 0.0
    %vm2092 = vcmp.gt.f32.partialorder %v2084, 0.0
    %vm2093 = vcmp.gt.f32.partialorder %v2086, 0.0
    %v2094 = vmul.f32 %v2002, 0.2
    %v2095 = vmul.f32 %v2004, 0.2
    %v2096 = vmul.f32 %v2084, 0.2
    %v2097 = vmul.f32 %v2086, 0.2
    %v2098 = vsel %vm2090, %v2002, %v2094
    %v2099 = vsel %vm2091, %v2004, %v2095
    %v2100 = vsel %vm2092, %v2084, %v2096
    %v2101 = vsel %vm2093, %v2086, %v2097
    %v2102 = vld [vmem:[#allocation7 + $0x20] sm:$0xff]
    %v2103 = vld [vmem:[#allocation7 + $0x28] sm:$0xff]
    %v2104 = vld [vmem:[#allocation7 + $0x50] sm:$0xff]
    %v2105 = vld [vmem:[#allocation7 + $0x58] sm:$0xff]
    %v2106 = vld [vmem:[#allocation7 + $0x80] sm:$0xff]
    %v2107 = vld [vmem:[#allocation7 + $0x88] sm:$0xff]
    %v2108 = vld [vmem:[#allocation7 + $0xb0] sm:$0xff]
    %v2109 = vld [vmem:[#allocation7 + $0xb8] sm:$0xff]
    %v2110 = vld [vmem:[#allocation7 + $0xe0] sm:$0xff]
    %v2111 = vld [vmem:[#allocation7 + $0xe8] sm:$0xff]
    %v2112 = vld [vmem:[#allocation7 + $0x110] sm:$0xff]
    %v2113 = vld [vmem:[#allocation7 + $0x118] sm:$0xff]
    %v2114 = vld [vmem:[#allocation7 + $0x140] sm:$0xff]
    %v2115 = vld [vmem:[#allocation7 + $0x148] sm:$0xff]
    %v2116 = vld [vmem:[#allocation7 + $0x170] sm:$0xff]
    %v2117 = vld [vmem:[#allocation7 + $0x178] sm:$0xff]
    %v2118 = vld [vmem:[#allocation7 + $0x1a0] sm:$0xff]
    %v2119 = vld [vmem:[#allocation7 + $0x1a8] sm:$0xff]
    %v2120 = vld [vmem:[#allocation7 + $0x1d0] sm:$0xff]
    %v2121 = vld [vmem:[#allocation7 + $0x1d8] sm:$0xff]
    %v2122 = vld [vmem:[#allocation7 + $0x200] sm:$0xff]
    %v2123 = vld [vmem:[#allocation7 + $0x208] sm:$0xff]
    %v2124 = vld [vmem:[#allocation7 + $0x230] sm:$0xff]
    %v2125 = vld [vmem:[#allocation7 + $0x238] sm:$0xff]
    %v2126 = vld [vmem:[#allocation7 + $0x260] sm:$0xff]
    %v2127 = vld [vmem:[#allocation7 + $0x268] sm:$0xff]
    %v2128 = vld [vmem:[#allocation7 + $0x290] sm:$0xff]
    %v2129 = vld [vmem:[#allocation7 + $0x298] sm:$0xff]
    %v2130 = vld [vmem:[#allocation7 + $0x2c0] sm:$0xff]
    %v2131 = vld [vmem:[#allocation7 + $0x2c8] sm:$0xff]
    %v2132 = vld [vmem:[#allocation7 + $0x2f0] sm:$0xff]
    %v2133 = vld [vmem:[#allocation7 + $0x2f8] sm:$0xff]
    %v2134 = vld [vmem:[#allocation7 + $0x320] sm:$0xff]
    %v2135 = vld [vmem:[#allocation7 + $0x328] sm:$0xff]
    %v2136 = vld [vmem:[#allocation7 + $0x350] sm:$0xff]
    %v2137 = vld [vmem:[#allocation7 + $0x358] sm:$0xff]
    %v2138 = vld [vmem:[#allocation7 + $0x380] sm:$0xff]
    %v2139 = vld [vmem:[#allocation7 + $0x388] sm:$0xff]
    %v2140 = vld [vmem:[#allocation7 + $0x3b0] sm:$0xff]
    %v2141 = vld [vmem:[#allocation7 + $0x3b8] sm:$0xff]
    %v2142 = vld [vmem:[#allocation7 + $0x3e0] sm:$0xff]
    %v2143 = vld [vmem:[#allocation7 + $0x3e8] sm:$0xff]
    %v2144 = vld [vmem:[#allocation7 + $0x410] sm:$0xff]
    %v2145 = vld [vmem:[#allocation7 + $0x418] sm:$0xff]
    %v2146 = vld [vmem:[#allocation7 + $0x440] sm:$0xff]
    %v2147 = vld [vmem:[#allocation7 + $0x448] sm:$0xff]
    %v2148 = vld [vmem:[#allocation7 + $0x470] sm:$0xff]
    %v2149 = vld [vmem:[#allocation7 + $0x478] sm:$0xff]
    %v2150 = vld [vmem:[#allocation7 + $0x4a0] sm:$0xff]
    %v2151 = vld [vmem:[#allocation7 + $0x4a8] sm:$0xff]
    %v2152 = vld [vmem:[#allocation7 + $0x4d0] sm:$0xff]
    %v2153 = vld [vmem:[#allocation7 + $0x4d8] sm:$0xff]
    %v2154 = vld [vmem:[#allocation7 + $0x500] sm:$0xff]
    %v2155 = vld [vmem:[#allocation7 + $0x508] sm:$0xff]
    %v2156 = vld [vmem:[#allocation7 + $0x530] sm:$0xff]
    %v2157 = vld [vmem:[#allocation7 + $0x538] sm:$0xff]
    %v2158 = vld [vmem:[#allocation7 + $0x560] sm:$0xff]
    %v2159 = vld [vmem:[#allocation7 + $0x568] sm:$0xff]
    %v2160 = vld [vmem:[#allocation7 + $0x590] sm:$0xff]
    %v2161 = vld [vmem:[#allocation7 + $0x598] sm:$0xff]
    %v2162 = vld [vmem:[#allocation7 + $0x5c0] sm:$0xff]
    %v2163 = vld [vmem:[#allocation7 + $0x5c8] sm:$0xff]
    %v2164 = vld [vmem:[#allocation7 + $0x5f0] sm:$0xff]
    %v2165 = vld [vmem:[#allocation7 + $0x5f8] sm:$0xff]
    %v2166 = vld [vmem:[#allocation7 + $0x620] sm:$0xff]
    %v2167 = vld [vmem:[#allocation7 + $0x628] sm:$0xff]
    %v2168 = vld [vmem:[#allocation7 + $0x650] sm:$0xff]
    %v2169 = vld [vmem:[#allocation7 + $0x658] sm:$0xff]
    %v2170 = vld [vmem:[#allocation7 + $0x680] sm:$0xff]
    %v2171 = vld [vmem:[#allocation7 + $0x688] sm:$0xff]
    %v2172 = vld [vmem:[#allocation7 + $0x6b0] sm:$0xff]
    %v2173 = vld [vmem:[#allocation7 + $0x6b8] sm:$0xff]
    %v2174 = vld [vmem:[#allocation7 + $0x6e0] sm:$0xff]
    %v2175 = vld [vmem:[#allocation7 + $0x6e8] sm:$0xff]
    %v2176 = vld [vmem:[#allocation7 + $0x710] sm:$0xff]
    %v2177 = vld [vmem:[#allocation7 + $0x718] sm:$0xff]
    %v2178 = vld [vmem:[#allocation7 + $0x740] sm:$0xff]
    %v2179 = vld [vmem:[#allocation7 + $0x748] sm:$0xff]
    %v2180 = vld [vmem:[#allocation7 + $0x770] sm:$0xff]
    %v2181 = vld [vmem:[#allocation7 + $0x778] sm:$0xff]
    %v2182 = vld [vmem:[#allocation7 + $0x7a0] sm:$0xff]
    %v2183 = vld [vmem:[#allocation7 + $0x7a8] sm:$0xff]
    %v2184 = vld [vmem:[#allocation7 + $0x7d0] sm:$0xff]
    %v2185 = vld [vmem:[#allocation7 + $0x7d8] sm:$0xff]
    %v2186 = vld [vmem:[#allocation7 + $0x800] sm:$0xff]
    %v2187 = vld [vmem:[#allocation7 + $0x808] sm:$0xff]
    %v2188 = vld [vmem:[#allocation7 + $0x830] sm:$0xff]
    %v2189 = vld [vmem:[#allocation7 + $0x838] sm:$0xff]
    %v2190 = vld [vmem:[#allocation7 + $0x860] sm:$0xff]
    %v2191 = vld [vmem:[#allocation7 + $0x868] sm:$0xff]
    %v2192 = vld [vmem:[#allocation7 + $0x890] sm:$0xff]
    %v2193 = vld [vmem:[#allocation7 + $0x898] sm:$0xff]
    %v2194 = vld [vmem:[#allocation7 + $0x8c0] sm:$0xff]
    %v2195 = vld [vmem:[#allocation7 + $0x8c8] sm:$0xff]
    %v2196 = vld [vmem:[#allocation7 + $0x8f0] sm:$0xff]
    %v2197 = vld [vmem:[#allocation7 + $0x8f8] sm:$0xff]
    %v2198 = vld [vmem:[#allocation7 + $0x920] sm:$0xff]
    %v2199 = vld [vmem:[#allocation7 + $0x928] sm:$0xff]
    %v2200 = vld [vmem:[#allocation7 + $0x950] sm:$0xff]
    %v2201 = vld [vmem:[#allocation7 + $0x958] sm:$0xff]
    %v2202 = vld [vmem:[#allocation7 + $0x980] sm:$0xff]
    %v2203 = vld [vmem:[#allocation7 + $0x988] sm:$0xff]
    %v2204 = vld [vmem:[#allocation7 + $0x9b0] sm:$0xff]
    %v2205 = vld [vmem:[#allocation7 + $0x9b8] sm:$0xff]
    %v2206 = vld [vmem:[#allocation7 + $0x9e0] sm:$0xff]
    %v2207 = vld [vmem:[#allocation7 + $0x9e8] sm:$0xff]
    %v2208 = vld [vmem:[#allocation7 + $0xa10] sm:$0xff]
    %v2209 = vld [vmem:[#allocation7 + $0xa18] sm:$0xff]
    %v2210 = vld [vmem:[#allocation7 + $0xa40] sm:$0xff]
    %v2211 = vld [vmem:[#allocation7 + $0xa48] sm:$0xff]
    %v2212 = vld [vmem:[#allocation7 + $0xa70] sm:$0xff]
    %v2213 = vld [vmem:[#allocation7 + $0xa78] sm:$0xff]
    %v2214 = vld [vmem:[#allocation7 + $0xaa0] sm:$0xff]
    %v2215 = vld [vmem:[#allocation7 + $0xaa8] sm:$0xff]
    %v2216 = vld [vmem:[#allocation7 + $0xad0] sm:$0xff]
    %v2217 = vld [vmem:[#allocation7 + $0xad8] sm:$0xff]
    %v2218 = vld [vmem:[#allocation7 + $0xb00] sm:$0xff]
    %v2219 = vld [vmem:[#allocation7 + $0xb08] sm:$0xff]
    %v2220 = vld [vmem:[#allocation7 + $0xb30] sm:$0xff]
    %v2221 = vld [vmem:[#allocation7 + $0xb38] sm:$0xff]
    %v2222 = vld [vmem:[#allocation7 + $0xb60] sm:$0xff]
    %v2223 = vld [vmem:[#allocation7 + $0xb68] sm:$0xff]
    %v2224 = vld [vmem:[#allocation7 + $0xb90] sm:$0xff]
    %v2225 = vld [vmem:[#allocation7 + $0xb98] sm:$0xff]
    %v2226 = vld [vmem:[#allocation7 + $0xbc0] sm:$0xff]
    %v2227 = vld [vmem:[#allocation7 + $0xbc8] sm:$0xff]
    %v2228 = vld [vmem:[#allocation7 + $0xbf0] sm:$0xff]
    %v2229 = vld [vmem:[#allocation7 + $0xbf8] sm:$0xff]
    %v2230 = vpack.c.bf16 %v2098, %v2098
    %v2231 = vpack.c.bf16 %v2099, %v2099
    %v2232 = vpack.c.bf16 %v2100, %v2100
    %v2233 = vpack.c.bf16 %v2101, %v2101
    %s2234 = scalar_lea.vmem [#allocation5], 3
    %v2235 = vld [vmem:[%s2234] ss:$4 sm:$0xf]
    %v2237 = vlaneseq
    %v2238 = vshrl.u32 %v2237, 7
    %v2239 = vsub.s32 0, %v2238
    %v2240 = vrot.slane %v2235, %v2239
    %v2241 = vlaneseq
    %v2242 = vshrl.u32 %v2241, 7
    %v2243 = vsub.s32 1, %v2242
    %v2244 = vrot.slane %v2235, %v2243
    %v2245 = vlaneseq
    %v2246 = vshrl.u32 %v2245, 7
    %v2247 = vsub.s32 2, %v2246
    %v2248 = vrot.slane %v2235, %v2247
    %v2249 = vlaneseq
    %v2250 = vshrl.u32 %v2249, 7
    %v2251 = vsub.s32 3, %v2250
    %v2252 = vrot.slane %v2235, %v2251
    %v2385 = vunpack.c.l.b16 %v2102
    %v2386 = vunpack.c.h.b16 %v2102
    %v2387 = vunpack.c.l.b16 %v2103
    %v2388 = vunpack.c.h.b16 %v2103
    %v2389 = vunpack.c.l.b16 %v2104
    %v2390 = vunpack.c.h.b16 %v2104
    %v2391 = vunpack.c.l.b16 %v2105
    %v2392 = vunpack.c.h.b16 %v2105
    %v2393 = vunpack.c.l.b16 %v2106
    %v2394 = vunpack.c.h.b16 %v2106
    %v2395 = vunpack.c.l.b16 %v2107
    %v2396 = vunpack.c.h.b16 %v2107
    %v2397 = vunpack.c.l.b16 %v2108
    %v2398 = vunpack.c.h.b16 %v2108
    %v2399 = vunpack.c.l.b16 %v2109
    %v2400 = vunpack.c.h.b16 %v2109
    %v2401 = vunpack.c.l.b16 %v2110
    %v2402 = vunpack.c.h.b16 %v2110
    %v2403 = vunpack.c.l.b16 %v2111
    %v2404 = vunpack.c.h.b16 %v2111
    %v2405 = vunpack.c.l.b16 %v2112
    %v2406 = vunpack.c.h.b16 %v2112
    %v2407 = vunpack.c.l.b16 %v2113
    %v2408 = vunpack.c.h.b16 %v2113
    %v2409 = vunpack.c.l.b16 %v2114
    %v2410 = vunpack.c.h.b16 %v2114
    %v2411 = vunpack.c.l.b16 %v2115
    %v2412 = vunpack.c.h.b16 %v2115
    %v2413 = vunpack.c.l.b16 %v2116
    %v2414 = vunpack.c.h.b16 %v2116
    %v2415 = vunpack.c.l.b16 %v2117
    %v2416 = vunpack.c.h.b16 %v2117
    %v2417 = vunpack.c.l.b16 %v2118
    %v2418 = vunpack.c.h.b16 %v2118
    %v2419 = vunpack.c.l.b16 %v2119
    %v2420 = vunpack.c.h.b16 %v2119
    %v2421 = vunpack.c.l.b16 %v2120
    %v2422 = vunpack.c.h.b16 %v2120
    %v2423 = vunpack.c.l.b16 %v2121
    %v2424 = vunpack.c.h.b16 %v2121
    %v2425 = vunpack.c.l.b16 %v2122
    %v2426 = vunpack.c.h.b16 %v2122
    %v2427 = vunpack.c.l.b16 %v2123
    %v2428 = vunpack.c.h.b16 %v2123
    %v2429 = vunpack.c.l.b16 %v2124
    %v2430 = vunpack.c.h.b16 %v2124
    %v2431 = vunpack.c.l.b16 %v2125
    %v2432 = vunpack.c.h.b16 %v2125
    %v2433 = vunpack.c.l.b16 %v2126
    %v2434 = vunpack.c.h.b16 %v2126
    %v2435 = vunpack.c.l.b16 %v2127
    %v2436 = vunpack.c.h.b16 %v2127
    %v2437 = vunpack.c.l.b16 %v2128
    %v2438 = vunpack.c.h.b16 %v2128
    %v2439 = vunpack.c.l.b16 %v2129
    %v2440 = vunpack.c.h.b16 %v2129
    %v2441 = vunpack.c.l.b16 %v2130
    %v2442 = vunpack.c.h.b16 %v2130
    %v2443 = vunpack.c.l.b16 %v2131
    %v2444 = vunpack.c.h.b16 %v2131
    %v2445 = vunpack.c.l.b16 %v2132
    %v2446 = vunpack.c.h.b16 %v2132
    %v2447 = vunpack.c.l.b16 %v2133
    %v2448 = vunpack.c.h.b16 %v2133
    %v2449 = vunpack.c.l.b16 %v2134
    %v2450 = vunpack.c.h.b16 %v2134
    %v2451 = vunpack.c.l.b16 %v2135
    %v2452 = vunpack.c.h.b16 %v2135
    %v2453 = vunpack.c.l.b16 %v2136
    %v2454 = vunpack.c.h.b16 %v2136
    %v2455 = vunpack.c.l.b16 %v2137
    %v2456 = vunpack.c.h.b16 %v2137
    %v2457 = vunpack.c.l.b16 %v2138
    %v2458 = vunpack.c.h.b16 %v2138
    %v2459 = vunpack.c.l.b16 %v2139
    %v2460 = vunpack.c.h.b16 %v2139
    %v2461 = vunpack.c.l.b16 %v2140
    %v2462 = vunpack.c.h.b16 %v2140
    %v2463 = vunpack.c.l.b16 %v2141
    %v2464 = vunpack.c.h.b16 %v2141
    %v2465 = vunpack.c.l.b16 %v2142
    %v2466 = vunpack.c.h.b16 %v2142
    %v2467 = vunpack.c.l.b16 %v2143
    %v2468 = vunpack.c.h.b16 %v2143
    %v2469 = vunpack.c.l.b16 %v2144
    %v2470 = vunpack.c.h.b16 %v2144
    %v2471 = vunpack.c.l.b16 %v2145
    %v2472 = vunpack.c.h.b16 %v2145
    %v2473 = vunpack.c.l.b16 %v2146
    %v2474 = vunpack.c.h.b16 %v2146
    %v2475 = vunpack.c.l.b16 %v2147
    %v2476 = vunpack.c.h.b16 %v2147
    %v2477 = vunpack.c.l.b16 %v2148
    %v2478 = vunpack.c.h.b16 %v2148
    %v2479 = vunpack.c.l.b16 %v2149
    %v2480 = vunpack.c.h.b16 %v2149
    %v2481 = vunpack.c.l.b16 %v2150
    %v2482 = vunpack.c.h.b16 %v2150
    %v2483 = vunpack.c.l.b16 %v2151
    %v2484 = vunpack.c.h.b16 %v2151
    %v2485 = vunpack.c.l.b16 %v2152
    %v2486 = vunpack.c.h.b16 %v2152
    %v2487 = vunpack.c.l.b16 %v2153
    %v2488 = vunpack.c.h.b16 %v2153
    %v2489 = vunpack.c.l.b16 %v2154
    %v2490 = vunpack.c.h.b16 %v2154
    %v2491 = vunpack.c.l.b16 %v2155
    %v2492 = vunpack.c.h.b16 %v2155
    %v2493 = vunpack.c.l.b16 %v2156
    %v2494 = vunpack.c.h.b16 %v2156
    %v2495 = vunpack.c.l.b16 %v2157
    %v2496 = vunpack.c.h.b16 %v2157
    %v2497 = vunpack.c.l.b16 %v2158
    %v2498 = vunpack.c.h.b16 %v2158
    %v2499 = vunpack.c.l.b16 %v2159
    %v2500 = vunpack.c.h.b16 %v2159
    %v2501 = vunpack.c.l.b16 %v2160
    %v2502 = vunpack.c.h.b16 %v2160
    %v2503 = vunpack.c.l.b16 %v2161
    %v2504 = vunpack.c.h.b16 %v2161
    %v2505 = vunpack.c.l.b16 %v2162
    %v2506 = vunpack.c.h.b16 %v2162
    %v2507 = vunpack.c.l.b16 %v2163
    %v2508 = vunpack.c.h.b16 %v2163
    %v2509 = vunpack.c.l.b16 %v2164
    %v2510 = vunpack.c.h.b16 %v2164
    %v2511 = vunpack.c.l.b16 %v2165
    %v2512 = vunpack.c.h.b16 %v2165
    %v2513 = vunpack.c.l.b16 %v2166
    %v2514 = vunpack.c.h.b16 %v2166
    %v2515 = vunpack.c.l.b16 %v2167
    %v2516 = vunpack.c.h.b16 %v2167
    %v2517 = vunpack.c.l.b16 %v2168
    %v2518 = vunpack.c.h.b16 %v2168
    %v2519 = vunpack.c.l.b16 %v2169
    %v2520 = vunpack.c.h.b16 %v2169
    %v2521 = vunpack.c.l.b16 %v2170
    %v2522 = vunpack.c.h.b16 %v2170
    %v2523 = vunpack.c.l.b16 %v2171
    %v2524 = vunpack.c.h.b16 %v2171
    %v2525 = vunpack.c.l.b16 %v2172
    %v2526 = vunpack.c.h.b16 %v2172
    %v2527 = vunpack.c.l.b16 %v2173
    %v2528 = vunpack.c.h.b16 %v2173
    %v2529 = vunpack.c.l.b16 %v2174
    %v2530 = vunpack.c.h.b16 %v2174
    %v2531 = vunpack.c.l.b16 %v2175
    %v2532 = vunpack.c.h.b16 %v2175
    %v2533 = vunpack.c.l.b16 %v2176
    %v2534 = vunpack.c.h.b16 %v2176
    %v2535 = vunpack.c.l.b16 %v2177
    %v2536 = vunpack.c.h.b16 %v2177
    %v2537 = vunpack.c.l.b16 %v2178
    %v2538 = vunpack.c.h.b16 %v2178
    %v2539 = vunpack.c.l.b16 %v2179
    %v2540 = vunpack.c.h.b16 %v2179
    %v2541 = vunpack.c.l.b16 %v2180
    %v2542 = vunpack.c.h.b16 %v2180
    %v2543 = vunpack.c.l.b16 %v2181
    %v2544 = vunpack.c.h.b16 %v2181
    %v2545 = vunpack.c.l.b16 %v2182
    %v2546 = vunpack.c.h.b16 %v2182
    %v2547 = vunpack.c.l.b16 %v2183
    %v2548 = vunpack.c.h.b16 %v2183
    %v2549 = vunpack.c.l.b16 %v2184
    %v2550 = vunpack.c.h.b16 %v2184
    %v2551 = vunpack.c.l.b16 %v2185
    %v2552 = vunpack.c.h.b16 %v2185
    %v2553 = vunpack.c.l.b16 %v2186
    %v2554 = vunpack.c.h.b16 %v2186
    %v2555 = vunpack.c.l.b16 %v2187
    %v2556 = vunpack.c.h.b16 %v2187
    %v2557 = vunpack.c.l.b16 %v2188
    %v2558 = vunpack.c.h.b16 %v2188
    %v2559 = vunpack.c.l.b16 %v2189
    %v2560 = vunpack.c.h.b16 %v2189
    %v2561 = vunpack.c.l.b16 %v2190
    %v2562 = vunpack.c.h.b16 %v2190
    %v2563 = vunpack.c.l.b16 %v2191
    %v2564 = vunpack.c.h.b16 %v2191
    %v2565 = vunpack.c.l.b16 %v2192
    %v2566 = vunpack.c.h.b16 %v2192
    %v2567 = vunpack.c.l.b16 %v2193
    %v2568 = vunpack.c.h.b16 %v2193
    %v2569 = vunpack.c.l.b16 %v2194
    %v2570 = vunpack.c.h.b16 %v2194
    %v2571 = vunpack.c.l.b16 %v2195
    %v2572 = vunpack.c.h.b16 %v2195
    %v2573 = vunpack.c.l.b16 %v2196
    %v2574 = vunpack.c.h.b16 %v2196
    %v2575 = vunpack.c.l.b16 %v2197
    %v2576 = vunpack.c.h.b16 %v2197
    %v2577 = vunpack.c.l.b16 %v2198
    %v2578 = vunpack.c.h.b16 %v2198
    %v2579 = vunpack.c.l.b16 %v2199
    %v2580 = vunpack.c.h.b16 %v2199
    %v2581 = vunpack.c.l.b16 %v2200
    %v2582 = vunpack.c.h.b16 %v2200
    %v2583 = vunpack.c.l.b16 %v2201
    %v2584 = vunpack.c.h.b16 %v2201
    %v2585 = vunpack.c.l.b16 %v2202
    %v2586 = vunpack.c.h.b16 %v2202
    %v2587 = vunpack.c.l.b16 %v2203
    %v2588 = vunpack.c.h.b16 %v2203
    %v2589 = vunpack.c.l.b16 %v2204
    %v2590 = vunpack.c.h.b16 %v2204
    %v2591 = vunpack.c.l.b16 %v2205
    %v2592 = vunpack.c.h.b16 %v2205
    %v2593 = vunpack.c.l.b16 %v2206
    %v2594 = vunpack.c.h.b16 %v2206
    %v2595 = vunpack.c.l.b16 %v2207
    %v2596 = vunpack.c.h.b16 %v2207
    %v2597 = vunpack.c.l.b16 %v2208
    %v2598 = vunpack.c.h.b16 %v2208
    %v2599 = vunpack.c.l.b16 %v2209
    %v2600 = vunpack.c.h.b16 %v2209
    %v2601 = vunpack.c.l.b16 %v2210
    %v2602 = vunpack.c.h.b16 %v2210
    %v2603 = vunpack.c.l.b16 %v2211
    %v2604 = vunpack.c.h.b16 %v2211
    %v2605 = vunpack.c.l.b16 %v2212
    %v2606 = vunpack.c.h.b16 %v2212
    %v2607 = vunpack.c.l.b16 %v2213
    %v2608 = vunpack.c.h.b16 %v2213
    %v2609 = vunpack.c.l.b16 %v2214
    %v2610 = vunpack.c.h.b16 %v2214
    %v2611 = vunpack.c.l.b16 %v2215
    %v2612 = vunpack.c.h.b16 %v2215
    %v2613 = vunpack.c.l.b16 %v2216
    %v2614 = vunpack.c.h.b16 %v2216
    %v2615 = vunpack.c.l.b16 %v2217
    %v2616 = vunpack.c.h.b16 %v2217
    %v2617 = vunpack.c.l.b16 %v2218
    %v2618 = vunpack.c.h.b16 %v2218
    %v2619 = vunpack.c.l.b16 %v2219
    %v2620 = vunpack.c.h.b16 %v2219
    %v2621 = vunpack.c.l.b16 %v2220
    %v2622 = vunpack.c.h.b16 %v2220
    %v2623 = vunpack.c.l.b16 %v2221
    %v2624 = vunpack.c.h.b16 %v2221
    %v2625 = vunpack.c.l.b16 %v2222
    %v2626 = vunpack.c.h.b16 %v2222
    %v2627 = vunpack.c.l.b16 %v2223
    %v2628 = vunpack.c.h.b16 %v2223
    %v2629 = vunpack.c.l.b16 %v2224
    %v2630 = vunpack.c.h.b16 %v2224
    %v2631 = vunpack.c.l.b16 %v2225
    %v2632 = vunpack.c.h.b16 %v2225
    %v2633 = vunpack.c.l.b16 %v2226
    %v2634 = vunpack.c.h.b16 %v2226
    %v2635 = vunpack.c.l.b16 %v2227
    %v2636 = vunpack.c.h.b16 %v2227
    %v2637 = vunpack.c.l.b16 %v2228
    %v2638 = vunpack.c.h.b16 %v2228
    %v2639 = vunpack.c.l.b16 %v2229
    %v2640 = vunpack.c.h.b16 %v2229
    %v2641 = vpack.c.b16 %v2389, %v2385
    %v2642 = vpack.c.b16 %v2390, %v2386
    %v2643 = vpack.c.b16 %v2391, %v2387
    %v2644 = vpack.c.b16 %v2392, %v2388
    %v2645 = vpack.c.b16 %v2397, %v2393
    %v2646 = vpack.c.b16 %v2398, %v2394
    %v2647 = vpack.c.b16 %v2399, %v2395
    %v2648 = vpack.c.b16 %v2400, %v2396
    %v2649 = vpack.c.b16 %v2405, %v2401
    %v2650 = vpack.c.b16 %v2406, %v2402
    %v2651 = vpack.c.b16 %v2407, %v2403
    %v2652 = vpack.c.b16 %v2408, %v2404
    %v2653 = vpack.c.b16 %v2413, %v2409
    %v2654 = vpack.c.b16 %v2414, %v2410
    %v2655 = vpack.c.b16 %v2415, %v2411
    %v2656 = vpack.c.b16 %v2416, %v2412
    %v2657 = vpack.c.b16 %v2421, %v2417
    %v2658 = vpack.c.b16 %v2422, %v2418
    %v2659 = vpack.c.b16 %v2423, %v2419
    %v2660 = vpack.c.b16 %v2424, %v2420
    %v2661 = vpack.c.b16 %v2429, %v2425
    %v2662 = vpack.c.b16 %v2430, %v2426
    %v2663 = vpack.c.b16 %v2431, %v2427
    %v2664 = vpack.c.b16 %v2432, %v2428
    %v2665 = vpack.c.b16 %v2437, %v2433
    %v2666 = vpack.c.b16 %v2438, %v2434
    %v2667 = vpack.c.b16 %v2439, %v2435
    %v2668 = vpack.c.b16 %v2440, %v2436
    %v2669 = vpack.c.b16 %v2445, %v2441
    %v2670 = vpack.c.b16 %v2446, %v2442
    %v2671 = vpack.c.b16 %v2447, %v2443
    %v2672 = vpack.c.b16 %v2448, %v2444
    %v2673 = vpack.c.b16 %v2453, %v2449
    %v2674 = vpack.c.b16 %v2454, %v2450
    %v2675 = vpack.c.b16 %v2455, %v2451
    %v2676 = vpack.c.b16 %v2456, %v2452
    %v2677 = vpack.c.b16 %v2461, %v2457
    %v2678 = vpack.c.b16 %v2462, %v2458
    %v2679 = vpack.c.b16 %v2463, %v2459
    %v2680 = vpack.c.b16 %v2464, %v2460
    %v2681 = vpack.c.b16 %v2469, %v2465
    %v2682 = vpack.c.b16 %v2470, %v2466
    %v2683 = vpack.c.b16 %v2471, %v2467
    %v2684 = vpack.c.b16 %v2472, %v2468
    %v2685 = vpack.c.b16 %v2477, %v2473
    %v2686 = vpack.c.b16 %v2478, %v2474
    %v2687 = vpack.c.b16 %v2479, %v2475
    %v2688 = vpack.c.b16 %v2480, %v2476
    %v2689 = vpack.c.b16 %v2485, %v2481
    %v2690 = vpack.c.b16 %v2486, %v2482
    %v2691 = vpack.c.b16 %v2487, %v2483
    %v2692 = vpack.c.b16 %v2488, %v2484
    %v2693 = vpack.c.b16 %v2493, %v2489
    %v2694 = vpack.c.b16 %v2494, %v2490
    %v2695 = vpack.c.b16 %v2495, %v2491
    %v2696 = vpack.c.b16 %v2496, %v2492
    %v2697 = vpack.c.b16 %v2501, %v2497
    %v2698 = vpack.c.b16 %v2502, %v2498
    %v2699 = vpack.c.b16 %v2503, %v2499
    %v2700 = vpack.c.b16 %v2504, %v2500
    %v2701 = vpack.c.b16 %v2509, %v2505
    %v2702 = vpack.c.b16 %v2510, %v2506
    %v2703 = vpack.c.b16 %v2511, %v2507
    %v2704 = vpack.c.b16 %v2512, %v2508
    %v2705 = vpack.c.b16 %v2517, %v2513
    %v2706 = vpack.c.b16 %v2518, %v2514
    %v2707 = vpack.c.b16 %v2519, %v2515
    %v2708 = vpack.c.b16 %v2520, %v2516
    %v2709 = vpack.c.b16 %v2525, %v2521
    %v2710 = vpack.c.b16 %v2526, %v2522
    %v2711 = vpack.c.b16 %v2527, %v2523
    %v2712 = vpack.c.b16 %v2528, %v2524
    %v2713 = vpack.c.b16 %v2533, %v2529
    %v2714 = vpack.c.b16 %v2534, %v2530
    %v2715 = vpack.c.b16 %v2535, %v2531
    %v2716 = vpack.c.b16 %v2536, %v2532
    %v2717 = vpack.c.b16 %v2541, %v2537
    %v2718 = vpack.c.b16 %v2542, %v2538
    %v2719 = vpack.c.b16 %v2543, %v2539
    %v2720 = vpack.c.b16 %v2544, %v2540
    %v2721 = vpack.c.b16 %v2549, %v2545
    %v2722 = vpack.c.b16 %v2550, %v2546
    %v2723 = vpack.c.b16 %v2551, %v2547
    %v2724 = vpack.c.b16 %v2552, %v2548
    %v2725 = vpack.c.b16 %v2557, %v2553
    %v2726 = vpack.c.b16 %v2558, %v2554
    %v2727 = vpack.c.b16 %v2559, %v2555
    %v2728 = vpack.c.b16 %v2560, %v2556
    %v2729 = vpack.c.b16 %v2565, %v2561
    %v2730 = vpack.c.b16 %v2566, %v2562
    %v2731 = vpack.c.b16 %v2567, %v2563
    %v2732 = vpack.c.b16 %v2568, %v2564
    %v2733 = vpack.c.b16 %v2573, %v2569
    %v2734 = vpack.c.b16 %v2574, %v2570
    %v2735 = vpack.c.b16 %v2575, %v2571
    %v2736 = vpack.c.b16 %v2576, %v2572
    %v2737 = vpack.c.b16 %v2581, %v2577
    %v2738 = vpack.c.b16 %v2582, %v2578
    %v2739 = vpack.c.b16 %v2583, %v2579
    %v2740 = vpack.c.b16 %v2584, %v2580
    %v2741 = vpack.c.b16 %v2589, %v2585
    %v2742 = vpack.c.b16 %v2590, %v2586
    %v2743 = vpack.c.b16 %v2591, %v2587
    %v2744 = vpack.c.b16 %v2592, %v2588
    %v2745 = vpack.c.b16 %v2597, %v2593
    %v2746 = vpack.c.b16 %v2598, %v2594
    %v2747 = vpack.c.b16 %v2599, %v2595
    %v2748 = vpack.c.b16 %v2600, %v2596
    %v2749 = vpack.c.b16 %v2605, %v2601
    %v2750 = vpack.c.b16 %v2606, %v2602
    %v2751 = vpack.c.b16 %v2607, %v2603
    %v2752 = vpack.c.b16 %v2608, %v2604
    %v2753 = vpack.c.b16 %v2613, %v2609
    %v2754 = vpack.c.b16 %v2614, %v2610
    %v2755 = vpack.c.b16 %v2615, %v2611
    %v2756 = vpack.c.b16 %v2616, %v2612
    %v2757 = vpack.c.b16 %v2621, %v2617
    %v2758 = vpack.c.b16 %v2622, %v2618
    %v2759 = vpack.c.b16 %v2623, %v2619
    %v2760 = vpack.c.b16 %v2624, %v2620
    %v2761 = vpack.c.b16 %v2629, %v2625
    %v2762 = vpack.c.b16 %v2630, %v2626
    %v2763 = vpack.c.b16 %v2631, %v2627
    %v2764 = vpack.c.b16 %v2632, %v2628
    %v2765 = vpack.c.b16 %v2637, %v2633
    %v2766 = vpack.c.b16 %v2638, %v2634
    %v2767 = vpack.c.b16 %v2639, %v2635
    %v2768 = vpack.c.b16 %v2640, %v2636
    %2897 = vmatprep.subr.bf16.mxu0 %v2642
    %2898 = vmatpush1.bf16.msra.mxu0 %v2641
    %2899 = vmatprep.subr.bf16.mxu0 %v2646
    %2900 = vmatpush1.bf16.msra.mxu0 %v2645
    %2901 = vmatprep.subr.bf16.mxu0 %v2650
    %2902 = vmatpush1.bf16.msra.mxu0 %v2649
    %2903 = vmatprep.subr.bf16.mxu0 %v2654
    %2904 = vmatpush1.bf16.msra.mxu0 %v2653
    %2905 = vmatprep.subr.bf16.mxu0 %v2658
    %2906 = vmatpush1.bf16.msra.mxu0 %v2657
    %2907 = vmatprep.subr.bf16.mxu0 %v2662
    %2908 = vmatpush1.bf16.msra.mxu0 %v2661
    %2909 = vmatprep.subr.bf16.mxu0 %v2666
    %2910 = vmatpush1.bf16.msra.mxu0 %v2665
    %2911 = vmatprep.subr.bf16.mxu0 %v2670
    %2912 = vmatpush1.bf16.msra.mxu0 %v2669
    %2913 = vmatprep.subr.bf16.mxu0 %v2674
    %2914 = vmatpush1.bf16.msra.mxu0 %v2673
    %2915 = vmatprep.subr.bf16.mxu0 %v2678
    %2916 = vmatpush1.bf16.msra.mxu0 %v2677
    %2917 = vmatprep.subr.bf16.mxu0 %v2682
    %2918 = vmatpush1.bf16.msra.mxu0 %v2681
    %2919 = vmatprep.subr.bf16.mxu0 %v2686
    %2920 = vmatpush1.bf16.msra.mxu0 %v2685
    %2921 = vmatprep.subr.bf16.mxu0 %v2690
    %2922 = vmatpush1.bf16.msra.mxu0 %v2689
    %2923 = vmatprep.subr.bf16.mxu0 %v2694
    %2924 = vmatpush1.bf16.msra.mxu0 %v2693
    %2925 = vmatprep.subr.bf16.mxu0 %v2698
    %2926 = vmatpush1.bf16.msra.mxu0 %v2697
    %2927 = vmatprep.subr.bf16.mxu0 %v2702
    %2928 = vmatpush1.bf16.msra.mxu0 %v2701
    %2929 = vmatprep.mubr.bf16.mxu0 %v2231
    %2930 = vmatmul.mubr.bf16.gmra.mrb[0].mxu0 %v2230
    %v2931 = vpop.f32.mrb[0].mxu0
    %v2932 = vadd.f32 %v2240, %v2931
    %v2933 = vpop.f32.mrb[0].mxu0
    %v2934 = vadd.f32 %v2244, %v2933
    %v2935 = vpop.f32.mrb[0].mxu0
    %v2936 = vpop.f32.mrb[0].mxu0
    %2937 = vdwg.mxu0
    %2938 = vmatprep.subr.bf16.mxu0 %v2706
    %2939 = vmatpush1.bf16.msra.mxu0 %v2705
    %2940 = vmatprep.subr.bf16.mxu0 %v2710
    %2941 = vmatpush1.bf16.msra.mxu0 %v2709
    %2942 = vmatprep.subr.bf16.mxu0 %v2714
    %2943 = vmatpush1.bf16.msra.mxu0 %v2713
    %2944 = vmatprep.subr.bf16.mxu0 %v2718
    %2945 = vmatpush1.bf16.msra.mxu0 %v2717
    %2946 = vmatprep.subr.bf16.mxu0 %v2722
    %2947 = vmatpush1.bf16.msra.mxu0 %v2721
    %2948 = vmatprep.subr.bf16.mxu0 %v2726
    %2949 = vmatpush1.bf16.msra.mxu0 %v2725
    %2950 = vmatprep.subr.bf16.mxu0 %v2730
    %2951 = vmatpush1.bf16.msra.mxu0 %v2729
    %2952 = vmatprep.subr.bf16.mxu0 %v2734
    %2953 = vmatpush1.bf16.msra.mxu0 %v2733
    %2954 = vmatprep.subr.bf16.mxu0 %v2738
    %2955 = vmatpush1.bf16.msra.mxu0 %v2737
    %2956 = vmatprep.subr.bf16.mxu0 %v2742
    %2957 = vmatpush1.bf16.msra.mxu0 %v2741
    %2958 = vmatprep.subr.bf16.mxu0 %v2746
    %2959 = vmatpush1.bf16.msra.mxu0 %v2745
    %2960 = vmatprep.subr.bf16.mxu0 %v2750
    %2961 = vmatpush1.bf16.msra.mxu0 %v2749
    %2962 = vmatprep.subr.bf16.mxu0 %v2754
    %2963 = vmatpush1.bf16.msra.mxu0 %v2753
    %2964 = vmatprep.subr.bf16.mxu0 %v2758
    %2965 = vmatpush1.bf16.msra.mxu0 %v2757
    %2966 = vmatprep.subr.bf16.mxu0 %v2762
    %2967 = vmatpush1.bf16.msra.mxu0 %v2761
    %2968 = vmatprep.subr.bf16.mxu0 %v2766
    %2969 = vmatpush1.bf16.msra.mxu0 %v2765
    %2970 = vmatprep.mubr.bf16.mxu0 %v2233
    %2971 = vmatmul.mubr.bf16.gmra.mrb[0].mxu0 %v2232
    %v2972 = vpop.f32.mrb[0].mxu0
    %v2973 = vadd.f32 %v2932, %v2972
    %v2974 = vpop.f32.mrb[0].mxu0
    %v2975 = vadd.f32 %v2934, %v2974
    %v2976 = vpop.f32.mrb[0].mxu0
    %v2977 = vpop.f32.mrb[0].mxu0
    %2978 = vdwg.mxu0
    %2979 = vmatprep.subr.bf16.mxu0 %v2644
    %2980 = vmatpush1.bf16.msra.mxu0 %v2643
    %2981 = vmatprep.subr.bf16.mxu0 %v2648
    %2982 = vmatpush1.bf16.msra.mxu0 %v2647
    %2983 = vmatprep.subr.bf16.mxu0 %v2652
    %2984 = vmatpush1.bf16.msra.mxu0 %v2651
    %2985 = vmatprep.subr.bf16.mxu0 %v2656
    %2986 = vmatpush1.bf16.msra.mxu0 %v2655
    %2987 = vmatprep.subr.bf16.mxu0 %v2660
    %2988 = vmatpush1.bf16.msra.mxu0 %v2659
    %2989 = vmatprep.subr.bf16.mxu0 %v2664
    %2990 = vmatpush1.bf16.msra.mxu0 %v2663
    %2991 = vmatprep.subr.bf16.mxu0 %v2668
    %2992 = vmatpush1.bf16.msra.mxu0 %v2667
    %2993 = vmatprep.subr.bf16.mxu0 %v2672
    %2994 = vmatpush1.bf16.msra.mxu0 %v2671
    %2995 = vmatprep.subr.bf16.mxu0 %v2676
    %2996 = vmatpush1.bf16.msra.mxu0 %v2675
    %2997 = vmatprep.subr.bf16.mxu0 %v2680
    %2998 = vmatpush1.bf16.msra.mxu0 %v2679
    %2999 = vmatprep.subr.bf16.mxu0 %v2684
    %3000 = vmatpush1.bf16.msra.mxu0 %v2683
    %3001 = vmatprep.subr.bf16.mxu0 %v2688
    %3002 = vmatpush1.bf16.msra.mxu0 %v2687
    %3003 = vmatprep.subr.bf16.mxu0 %v2692
    %3004 = vmatpush1.bf16.msra.mxu0 %v2691
    %3005 = vmatprep.subr.bf16.mxu0 %v2696
    %3006 = vmatpush1.bf16.msra.mxu0 %v2695
    %3007 = vmatprep.subr.bf16.mxu0 %v2700
    %3008 = vmatpush1.bf16.msra.mxu0 %v2699
    %3009 = vmatprep.subr.bf16.mxu0 %v2704
    %3010 = vmatpush1.bf16.msra.mxu0 %v2703
    %3011 = vmatprep.mubr.bf16.mxu0 %v2231
    %3012 = vmatmul.mubr.bf16.gmra.mrb[0].mxu0 %v2230
    %v3013 = vpop.f32.mrb[0].mxu0
    %v3014 = vadd.f32 %v2248, %v3013
    %v3015 = vpop.f32.mrb[0].mxu0
    %v3016 = vadd.f32 %v2252, %v3015
    %v3017 = vpop.f32.mrb[0].mxu0
    %v3018 = vpop.f32.mrb[0].mxu0
    %3019 = vdwg.mxu0
    %3020 = vmatprep.subr.bf16.mxu0 %v2708
    %3021 = vmatpush1.bf16.msra.mxu0 %v2707
    %3022 = vmatprep.subr.bf16.mxu0 %v2712
    %3023 = vmatpush1.bf16.msra.mxu0 %v2711
    %3024 = vmatprep.subr.bf16.mxu0 %v2716
    %3025 = vmatpush1.bf16.msra.mxu0 %v2715
    %3026 = vmatprep.subr.bf16.mxu0 %v2720
    %3027 = vmatpush1.bf16.msra.mxu0 %v2719
    %3028 = vmatprep.subr.bf16.mxu0 %v2724
    %3029 = vmatpush1.bf16.msra.mxu0 %v2723
    %3030 = vmatprep.subr.bf16.mxu0 %v2728
    %3031 = vmatpush1.bf16.msra.mxu0 %v2727
    %3032 = vmatprep.subr.bf16.mxu0 %v2732
    %3033 = vmatpush1.bf16.msra.mxu0 %v2731
    %3034 = vmatprep.subr.bf16.mxu0 %v2736
    %3035 = vmatpush1.bf16.msra.mxu0 %v2735
    %3036 = vmatprep.subr.bf16.mxu0 %v2740
    %3037 = vmatpush1.bf16.msra.mxu0 %v2739
    %3038 = vmatprep.subr.bf16.mxu0 %v2744
    %3039 = vmatpush1.bf16.msra.mxu0 %v2743
    %3040 = vmatprep.subr.bf16.mxu0 %v2748
    %3041 = vmatpush1.bf16.msra.mxu0 %v2747
    %3042 = vmatprep.subr.bf16.mxu0 %v2752
    %3043 = vmatpush1.bf16.msra.mxu0 %v2751
    %3044 = vmatprep.subr.bf16.mxu0 %v2756
    %3045 = vmatpush1.bf16.msra.mxu0 %v2755
    %3046 = vmatprep.subr.bf16.mxu0 %v2760
    %3047 = vmatpush1.bf16.msra.mxu0 %v2759
    %3048 = vmatprep.subr.bf16.mxu0 %v2764
    %3049 = vmatpush1.bf16.msra.mxu0 %v2763
    %3050 = vmatprep.subr.bf16.mxu0 %v2768
    %3051 = vmatpush1.bf16.msra.mxu0 %v2767
    %3052 = vmatprep.mubr.bf16.mxu0 %v2233
    %3053 = vmatmul.mubr.bf16.gmra.mrb[0].mxu0 %v2232
    %v3054 = vpop.f32.mrb[0].mxu0
    %v3055 = vadd.f32 %v3014, %v3054
    %v3056 = vpop.f32.mrb[0].mxu0
    %v3057 = vadd.f32 %v3016, %v3056
    %v3058 = vpop.f32.mrb[0].mxu0
    %v3059 = vpop.f32.mrb[0].mxu0
    %3060 = vdwg.mxu0
    %3061 = vst [vmem:[#allocation8] sm:$0xff] %v2973
    %3062 = vst [vmem:[#allocation8 + $0x8] sm:$0xff] %v2975
    %3063 = vst [vmem:[#allocation8 + $0x10] sm:$0xff] %v3055
    %3064 = vst [vmem:[#allocation8 + $0x18] sm:$0xff] %v3057
    // Predicated region
    $region30: #{control_mapping_network.1} parent=1 // pred_check
      _
    $region31: #{control_mapping_network.1} parent=1 // pred_check_branch
      %3066 = sbr.rel (0) target = $region33
    $region32: #{control_mapping_network.1} parent=1 // pred_region
      %s3068 = ssub.s32 512, 512
      %3069 = vsyncadd [#allocation4], %s3068
      %s3071 = sshll.u32 [#allocation8], 4
      %s3072 = int_to_ptr.vmem [resolvable:$true] %s3071
      %3074 = dma.vmem_to_hbm [thread:$0]  %s3072, 512, %s4, [#allocation4]
    $region33: #{control_mapping_network.1} parent=1 // pred_fallthru
      _
    // Predicated region
    $region34: #{control_mapping_network.1} parent=1 // pred_check
      _
    $region35: #{control_mapping_network.1} parent=1 // pred_check_branch
      %3076 = sbr.rel (0) target = $region37
    $region36: #{control_mapping_network.1} parent=1 // pred_region
      %3077 = dma.done [#allocation4], 512
    $region37: #{control_mapping_network.1} parent=1 // pred_fallthru
      _
    %3078 = vsyncpa [#allocation3], 1
    %3079 = vsyncpa [#allocation6], 1
    %3080 = vsyncpa [#allocation4], 1

</llo_original>
